<compile_context>
chip_gen: v7x
topology: tpu7x:2x2x1
jax: 0.10.0
libtpu: 0.0.40
codegen_flags: <defaults>
</compile_context>

<pallas_src>
import jax
import jax.numpy as jnp
from jax.experimental import pallas as pl
from jax.experimental.pallas import tpu as pltpu


def _topk_embed_kernel(tags_ref, ehi_ref, elo_ref, o_ref, sel_ref):
    """tags_ref: (TB, C) f32; ehi/elo: (C_pad, D) bf16; o_ref: (TB, k*D);
    sel_ref: (k*TB, C_pad) bf16 one-hot scratch."""
    tb, c = tags_ref.shape
    c_pad, d = ehi_ref.shape
    k = sel_ref.shape[0] // tb

    t = tags_ref[...].astype(jnp.float32)                          # (TB, C)
    col = jax.lax.broadcasted_iota(jnp.int32, (1, c), 1)           # (1, C)
    col_pad = jax.lax.broadcasted_iota(jnp.int32, (1, c_pad), 1)   # (1, C_pad)
    neg = float("-inf")

    # k is small and static: unrolled Python loop so LLO sees the whole schedule.
    for j in range(k):
        m = jnp.max(t, axis=-1, keepdims=True)                     # (TB, 1)
        # lowest index among the maxima (matches lax.top_k tie-break order)
        idx = jnp.min(jnp.where(t == m, col, c), axis=-1, keepdims=True)
        # One-hot row over the padded class dim (idx < c, so pad columns stay 0);
        # written straight to VMEM scratch to keep the vreg live-set small.
        sel_ref[j * tb:(j + 1) * tb, :] = (col_pad == idx).astype(jnp.bfloat16)
        # knock the winner out for the next rank
        # TODO(synk): for inputs containing -inf with k close to C this sentinel
        # knockout could repeat an index (sigmoid-probability tags are safe).
        t = jnp.where(col == idx, neg, t)

    # Fused exact gather: one-hot (k*TB, C_pad) @ (C_pad, D), two DEFAULT-precision
    # bf16 passes (hi + lo residual) accumulated in f32.
    sel = sel_ref[...]
    acc = jnp.dot(sel, ehi_ref[...], preferred_element_type=jnp.float32)
    acc = acc + jnp.dot(sel, elo_ref[...], preferred_element_type=jnp.float32)

    # rank-major (k*TB, D) -> batch-major (TB, k*D): k lane-aligned slab stores.
    for j in range(k):
        o_ref[:, j * d:(j + 1) * d] = acc[j * tb:(j + 1) * tb, :].astype(o_ref.dtype)


def semantic_feature_extractor(tags, embed, *, k=10, block_b=None):
    """tags: (B, classes) f32; embed: (classes, D) -> (B, k, D) top-k embeddings."""
    B, C = tags.shape
    C_e, D = embed.shape
    assert C == C_e

    # Lane-dense class dim for the matmul contraction (156 -> 256).
    c_pad = pl.cdiv(C, 128) * 128

    # One-time bf16 hi/lo split + pad of the (tiny) embedding table.
    # Callers that reuse the table should hoist / cache these two arrays.
    emb_f32 = embed.astype(jnp.float32)
    emb_hi = emb_f32.astype(jnp.bfloat16)
    emb_lo = (emb_f32 - emb_hi.astype(jnp.float32)).astype(jnp.bfloat16)
    emb_hi = jnp.pad(emb_hi, ((0, c_pad - C), (0, 0)))
    emb_lo = jnp.pad(emb_lo, ((0, c_pad - C), (0, 0)))

    # Batch tile: multiple of 8 sublanes, default up to 128.
    # (v6e/128MiB VMEM: can be raised to 256+ for large B; keep <=256 on v7x.)
    if block_b is None:
        block_b = min(128, B)
    block_b = max(8, pl.cdiv(block_b, 8) * 8)
    b_pad = pl.cdiv(B, block_b) * block_b

    tags_f32 = tags.astype(jnp.float32)
    if b_pad != B:
        tags_f32 = jnp.pad(tags_f32, ((0, b_pad - B), (0, 0)))  # rows dropped later

    flops = 2 * 2 * k * b_pad * c_pad * D  # two bf16 MXU passes
    bytes_accessed = (tags_f32.size * 4 + emb_hi.size * 2 + emb_lo.size * 2
                      + b_pad * k * D * embed.dtype.itemsize)

    out = pl.pallas_call(
        _topk_embed_kernel,
        out_shape=jax.ShapeDtypeStruct((b_pad, k * D), embed.dtype),
        grid=(b_pad // block_b,),
        in_specs=[
            pl.BlockSpec((block_b, C), lambda i: (i, 0)),   # tags tile (unpadded C)
            pl.BlockSpec((c_pad, D), lambda i: (0, 0)),     # embed hi (resident)
            pl.BlockSpec((c_pad, D), lambda i: (0, 0)),     # embed lo residual
        ],
        out_specs=pl.BlockSpec((block_b, k * D), lambda i: (i, 0)),
        scratch_shapes=[pltpu.VMEM((k * block_b, c_pad), jnp.bfloat16)],
        compiler_params=pltpu.CompilerParams(
            dimension_semantics=("parallel",),
            vmem_limit_bytes=32 * 1024 * 1024),
        cost_estimate=pl.CostEstimate(
            flops=flops, transcendentals=0, bytes_accessed=bytes_accessed),
    )(tags_f32, emb_hi, emb_lo)

    # (B, k*D) -> (B, k, D): free reshape, no transpose, drop batch padding.
    return out[:B].reshape(B, k, D)


if __name__ == "__main__":
    # Shapes consistent with the module defaults: classes=156, D=512, k=10.
    batch = 8
    classes = 156
    semantic_features_dim = 512
    k = 10

    key = jax.random.PRNGKey(0)
    k_tags, k_emb = jax.random.split(key)
    # tags look like per-class probabilities (the MLC head's sigmoid output).
    tags = jax.random.uniform(k_tags, (batch, classes), jnp.float32)
    embed = jax.random.normal(k_emb, (classes, semantic_features_dim), jnp.float32)

    feats = semantic_feature_extractor(tags, embed, k=k)
    jax.block_until_ready(feats)

    # Pure-JAX reference: topk indices -> embedding rows.
    top_idx = jax.lax.top_k(tags, k)[1]                    # (B, k)
    ref = jnp.take(embed, top_idx, axis=0)                 # (B, k, D)

    assert feats.shape == (batch, k, semantic_features_dim)
    assert jnp.allclose(feats, ref, atol=1e-5, rtol=1e-5)

    print("KERNEL_OK")
</pallas_src>

<mosaic_0001>
module attributes {stable_mosaic.version = 11 : i64} {
  func.func @_topk_embed_kernel(%arg0: i32, %arg1: memref<8x156xf32, #tpu.memory_space<vmem>>, %arg2: memref<256x512xbf16, #tpu.memory_space<vmem>>, %arg3: memref<256x512xbf16, #tpu.memory_space<vmem>>, %arg4: memref<8x5120xf32, #tpu.memory_space<vmem>>, %arg5: memref<80x256xbf16, #tpu.memory_space<vmem>>) attributes {dimension_semantics = [#tpu.dimension_semantics<parallel>], iteration_bounds = array<i64: 1>, scalar_prefetch = 0 : i64, scratch_operands = 1 : i64, tpu.core_type = #tpu.core_type<tc>, window_params = [{transform_indices = @transform_0, window_bounds = array<i64: 8, 156>}, {pipeline_mode = #tpu.pipeline_mode<synchronous>, transform_indices = @transform_1, window_bounds = array<i64: 256, 512>}, {pipeline_mode = #tpu.pipeline_mode<synchronous>, transform_indices = @transform_2, window_bounds = array<i64: 256, 512>}, {transform_indices = @transform_3, window_bounds = array<i64: 8, 5120>}]} {
    %c0 = arith.constant 0 : index
    %c0_0 = arith.constant 0 : index
    %0 = vector.load %arg1[%c0, %c0_0] : memref<8x156xf32, #tpu.memory_space<vmem>>, vector<8x156xf32>
    %1 = tpu.iota {dimensions = array<i32: 1>} : vector<1x156xi32>
    %2 = tpu.iota {dimensions = array<i32: 1>} : vector<1x256xi32>
    %cst = arith.constant dense<0xFF800000> : vector<8xf32>
    %3 = vector.multi_reduction <maximumf>, %0, %cst [1] : vector<8x156xf32> to vector<8xf32>
    %4 = vector.shape_cast %3 : vector<8xf32> to vector<8x1xf32>
    %5 = vector.broadcast %4 : vector<8x1xf32> to vector<8x156xf32>
    %6 = arith.cmpf oeq, %0, %5 : vector<8x156xf32>
    %c156_i32 = arith.constant 156 : i32
    %7 = vector.shape_cast %1 : vector<1x156xi32> to vector<1x156xi32>
    %8 = vector.broadcast %7 : vector<1x156xi32> to vector<8x156xi32>
    %9 = vector.broadcast %c156_i32 : i32 to vector<8x156xi32>
    %10 = arith.select %6, %8, %9 : vector<8x156xi1>, vector<8x156xi32>
    %cst_1 = arith.constant dense<2147483647> : vector<8xi32>
    %11 = vector.multi_reduction <minsi>, %10, %cst_1 [1] : vector<8x156xi32> to vector<8xi32>
    %12 = vector.shape_cast %11 : vector<8xi32> to vector<8x1xi32>
    %13 = vector.broadcast %2 : vector<1x256xi32> to vector<8x256xi32>
    %14 = vector.broadcast %12 : vector<8x1xi32> to vector<8x256xi32>
    %15 = arith.cmpi eq, %13, %14 : vector<8x256xi32>
    %16 = arith.extui %15 : vector<8x256xi1> to vector<8x256xi32>
    %17 = arith.sitofp %16 : vector<8x256xi32> to vector<8x256xf32>
    %18 = arith.truncf %17 : vector<8x256xf32> to vector<8x256xbf16>
    %c0_2 = arith.constant 0 : index
    %c0_3 = arith.constant 0 : index
    %19 = vector.load %arg5[%c0_2, %c0_3] : memref<80x256xbf16, #tpu.memory_space<vmem>>, vector<8x256xbf16>
    tpu.vector_store %arg5[%c0_2, %c0_3], %18 {strides = array<i32>} : memref<80x256xbf16, #tpu.memory_space<vmem>>, vector<8x256xbf16>,
    %20 = vector.broadcast %1 : vector<1x156xi32> to vector<8x156xi32>
    %21 = vector.broadcast %12 : vector<8x1xi32> to vector<8x156xi32>
    %22 = arith.cmpi eq, %20, %21 : vector<8x156xi32>
    %cst_4 = arith.constant 0xFF800000 : f32
    %23 = vector.broadcast %cst_4 : f32 to vector<8x156xf32>
    %24 = arith.select %22, %23, %0 : vector<8x156xi1>, vector<8x156xf32>
    %cst_5 = arith.constant dense<0xFF800000> : vector<8xf32>
    %25 = vector.multi_reduction <maximumf>, %24, %cst_5 [1] : vector<8x156xf32> to vector<8xf32>
    %26 = vector.shape_cast %25 : vector<8xf32> to vector<8x1xf32>
    %27 = vector.broadcast %26 : vector<8x1xf32> to vector<8x156xf32>
    %28 = arith.cmpf oeq, %24, %27 : vector<8x156xf32>
    %c156_i32_6 = arith.constant 156 : i32
    %29 = vector.shape_cast %1 : vector<1x156xi32> to vector<1x156xi32>
    %30 = vector.broadcast %29 : vector<1x156xi32> to vector<8x156xi32>
    %31 = vector.broadcast %c156_i32_6 : i32 to vector<8x156xi32>
    %32 = arith.select %28, %30, %31 : vector<8x156xi1>, vector<8x156xi32>
    %cst_7 = arith.constant dense<2147483647> : vector<8xi32>
    %33 = vector.multi_reduction <minsi>, %32, %cst_7 [1] : vector<8x156xi32> to vector<8xi32>
    %34 = vector.shape_cast %33 : vector<8xi32> to vector<8x1xi32>
    %35 = vector.broadcast %2 : vector<1x256xi32> to vector<8x256xi32>
    %36 = vector.broadcast %34 : vector<8x1xi32> to vector<8x256xi32>
    %37 = arith.cmpi eq, %35, %36 : vector<8x256xi32>
    %38 = arith.extui %37 : vector<8x256xi1> to vector<8x256xi32>
    %39 = arith.sitofp %38 : vector<8x256xi32> to vector<8x256xf32>
    %40 = arith.truncf %39 : vector<8x256xf32> to vector<8x256xbf16>
    %c8 = arith.constant 8 : index
    %c0_8 = arith.constant 0 : index
    %41 = vector.load %arg5[%c8, %c0_8] : memref<80x256xbf16, #tpu.memory_space<vmem>>, vector<8x256xbf16>
    tpu.vector_store %arg5[%c8, %c0_8], %40 {strides = array<i32>} : memref<80x256xbf16, #tpu.memory_space<vmem>>, vector<8x256xbf16>,
    %42 = vector.broadcast %1 : vector<1x156xi32> to vector<8x156xi32>
    %43 = vector.broadcast %34 : vector<8x1xi32> to vector<8x156xi32>
    %44 = arith.cmpi eq, %42, %43 : vector<8x156xi32>
    %cst_9 = arith.constant 0xFF800000 : f32
    %45 = vector.broadcast %cst_9 : f32 to vector<8x156xf32>
    %46 = arith.select %44, %45, %24 : vector<8x156xi1>, vector<8x156xf32>
    %cst_10 = arith.constant dense<0xFF800000> : vector<8xf32>
    %47 = vector.multi_reduction <maximumf>, %46, %cst_10 [1] : vector<8x156xf32> to vector<8xf32>
    %48 = vector.shape_cast %47 : vector<8xf32> to vector<8x1xf32>
    %49 = vector.broadcast %48 : vector<8x1xf32> to vector<8x156xf32>
    %50 = arith.cmpf oeq, %46, %49 : vector<8x156xf32>
    %c156_i32_11 = arith.constant 156 : i32
    %51 = vector.shape_cast %1 : vector<1x156xi32> to vector<1x156xi32>
    %52 = vector.broadcast %51 : vector<1x156xi32> to vector<8x156xi32>
    %53 = vector.broadcast %c156_i32_11 : i32 to vector<8x156xi32>
    %54 = arith.select %50, %52, %53 : vector<8x156xi1>, vector<8x156xi32>
    %cst_12 = arith.constant dense<2147483647> : vector<8xi32>
    %55 = vector.multi_reduction <minsi>, %54, %cst_12 [1] : vector<8x156xi32> to vector<8xi32>
    %56 = vector.shape_cast %55 : vector<8xi32> to vector<8x1xi32>
    %57 = vector.broadcast %2 : vector<1x256xi32> to vector<8x256xi32>
    %58 = vector.broadcast %56 : vector<8x1xi32> to vector<8x256xi32>
    %59 = arith.cmpi eq, %57, %58 : vector<8x256xi32>
    %60 = arith.extui %59 : vector<8x256xi1> to vector<8x256xi32>
    %61 = arith.sitofp %60 : vector<8x256xi32> to vector<8x256xf32>
    %62 = arith.truncf %61 : vector<8x256xf32> to vector<8x256xbf16>
    %c16 = arith.constant 16 : index
    %c0_13 = arith.constant 0 : index
    %63 = vector.load %arg5[%c16, %c0_13] : memref<80x256xbf16, #tpu.memory_space<vmem>>, vector<8x256xbf16>
    tpu.vector_store %arg5[%c16, %c0_13], %62 {strides = array<i32>} : memref<80x256xbf16, #tpu.memory_space<vmem>>, vector<8x256xbf16>,
    %64 = vector.broadcast %1 : vector<1x156xi32> to vector<8x156xi32>
    %65 = vector.broadcast %56 : vector<8x1xi32> to vector<8x156xi32>
    %66 = arith.cmpi eq, %64, %65 : vector<8x156xi32>
    %cst_14 = arith.constant 0xFF800000 : f32
    %67 = vector.broadcast %cst_14 : f32 to vector<8x156xf32>
    %68 = arith.select %66, %67, %46 : vector<8x156xi1>, vector<8x156xf32>
    %cst_15 = arith.constant dense<0xFF800000> : vector<8xf32>
    %69 = vector.multi_reduction <maximumf>, %68, %cst_15 [1] : vector<8x156xf32> to vector<8xf32>
    %70 = vector.shape_cast %69 : vector<8xf32> to vector<8x1xf32>
    %71 = vector.broadcast %70 : vector<8x1xf32> to vector<8x156xf32>
    %72 = arith.cmpf oeq, %68, %71 : vector<8x156xf32>
    %c156_i32_16 = arith.constant 156 : i32
    %73 = vector.shape_cast %1 : vector<1x156xi32> to vector<1x156xi32>
    %74 = vector.broadcast %73 : vector<1x156xi32> to vector<8x156xi32>
    %75 = vector.broadcast %c156_i32_16 : i32 to vector<8x156xi32>
    %76 = arith.select %72, %74, %75 : vector<8x156xi1>, vector<8x156xi32>
    %cst_17 = arith.constant dense<2147483647> : vector<8xi32>
    %77 = vector.multi_reduction <minsi>, %76, %cst_17 [1] : vector<8x156xi32> to vector<8xi32>
    %78 = vector.shape_cast %77 : vector<8xi32> to vector<8x1xi32>
    %79 = vector.broadcast %2 : vector<1x256xi32> to vector<8x256xi32>
    %80 = vector.broadcast %78 : vector<8x1xi32> to vector<8x256xi32>
    %81 = arith.cmpi eq, %79, %80 : vector<8x256xi32>
    %82 = arith.extui %81 : vector<8x256xi1> to vector<8x256xi32>
    %83 = arith.sitofp %82 : vector<8x256xi32> to vector<8x256xf32>
    %84 = arith.truncf %83 : vector<8x256xf32> to vector<8x256xbf16>
    %c24 = arith.constant 24 : index
    %c0_18 = arith.constant 0 : index
    %85 = vector.load %arg5[%c24, %c0_18] : memref<80x256xbf16, #tpu.memory_space<vmem>>, vector<8x256xbf16>
    tpu.vector_store %arg5[%c24, %c0_18], %84 {strides = array<i32>} : memref<80x256xbf16, #tpu.memory_space<vmem>>, vector<8x256xbf16>,
    %86 = vector.broadcast %1 : vector<1x156xi32> to vector<8x156xi32>
    %87 = vector.broadcast %78 : vector<8x1xi32> to vector<8x156xi32>
    %88 = arith.cmpi eq, %86, %87 : vector<8x156xi32>
    %cst_19 = arith.constant 0xFF800000 : f32
    %89 = vector.broadcast %cst_19 : f32 to vector<8x156xf32>
    %90 = arith.select %88, %89, %68 : vector<8x156xi1>, vector<8x156xf32>
    %cst_20 = arith.constant dense<0xFF800000> : vector<8xf32>
    %91 = vector.multi_reduction <maximumf>, %90, %cst_20 [1] : vector<8x156xf32> to vector<8xf32>
    %92 = vector.shape_cast %91 : vector<8xf32> to vector<8x1xf32>
    %93 = vector.broadcast %92 : vector<8x1xf32> to vector<8x156xf32>
    %94 = arith.cmpf oeq, %90, %93 : vector<8x156xf32>
    %c156_i32_21 = arith.constant 156 : i32
    %95 = vector.shape_cast %1 : vector<1x156xi32> to vector<1x156xi32>
    %96 = vector.broadcast %95 : vector<1x156xi32> to vector<8x156xi32>
    %97 = vector.broadcast %c156_i32_21 : i32 to vector<8x156xi32>
    %98 = arith.select %94, %96, %97 : vector<8x156xi1>, vector<8x156xi32>
    %cst_22 = arith.constant dense<2147483647> : vector<8xi32>
    %99 = vector.multi_reduction <minsi>, %98, %cst_22 [1] : vector<8x156xi32> to vector<8xi32>
    %100 = vector.shape_cast %99 : vector<8xi32> to vector<8x1xi32>
    %101 = vector.broadcast %2 : vector<1x256xi32> to vector<8x256xi32>
    %102 = vector.broadcast %100 : vector<8x1xi32> to vector<8x256xi32>
    %103 = arith.cmpi eq, %101, %102 : vector<8x256xi32>
    %104 = arith.extui %103 : vector<8x256xi1> to vector<8x256xi32>
    %105 = arith.sitofp %104 : vector<8x256xi32> to vector<8x256xf32>
    %106 = arith.truncf %105 : vector<8x256xf32> to vector<8x256xbf16>
    %c32 = arith.constant 32 : index
    %c0_23 = arith.constant 0 : index
    %107 = vector.load %arg5[%c32, %c0_23] : memref<80x256xbf16, #tpu.memory_space<vmem>>, vector<8x256xbf16>
    tpu.vector_store %arg5[%c32, %c0_23], %106 {strides = array<i32>} : memref<80x256xbf16, #tpu.memory_space<vmem>>, vector<8x256xbf16>,
    %108 = vector.broadcast %1 : vector<1x156xi32> to vector<8x156xi32>
    %109 = vector.broadcast %100 : vector<8x1xi32> to vector<8x156xi32>
    %110 = arith.cmpi eq, %108, %109 : vector<8x156xi32>
    %cst_24 = arith.constant 0xFF800000 : f32
    %111 = vector.broadcast %cst_24 : f32 to vector<8x156xf32>
    %112 = arith.select %110, %111, %90 : vector<8x156xi1>, vector<8x156xf32>
    %cst_25 = arith.constant dense<0xFF800000> : vector<8xf32>
    %113 = vector.multi_reduction <maximumf>, %112, %cst_25 [1] : vector<8x156xf32> to vector<8xf32>
    %114 = vector.shape_cast %113 : vector<8xf32> to vector<8x1xf32>
    %115 = vector.broadcast %114 : vector<8x1xf32> to vector<8x156xf32>
    %116 = arith.cmpf oeq, %112, %115 : vector<8x156xf32>
    %c156_i32_26 = arith.constant 156 : i32
    %117 = vector.shape_cast %1 : vector<1x156xi32> to vector<1x156xi32>
    %118 = vector.broadcast %117 : vector<1x156xi32> to vector<8x156xi32>
    %119 = vector.broadcast %c156_i32_26 : i32 to vector<8x156xi32>
    %120 = arith.select %116, %118, %119 : vector<8x156xi1>, vector<8x156xi32>
    %cst_27 = arith.constant dense<2147483647> : vector<8xi32>
    %121 = vector.multi_reduction <minsi>, %120, %cst_27 [1] : vector<8x156xi32> to vector<8xi32>
    %122 = vector.shape_cast %121 : vector<8xi32> to vector<8x1xi32>
    %123 = vector.broadcast %2 : vector<1x256xi32> to vector<8x256xi32>
    %124 = vector.broadcast %122 : vector<8x1xi32> to vector<8x256xi32>
    %125 = arith.cmpi eq, %123, %124 : vector<8x256xi32>
    %126 = arith.extui %125 : vector<8x256xi1> to vector<8x256xi32>
    %127 = arith.sitofp %126 : vector<8x256xi32> to vector<8x256xf32>
    %128 = arith.truncf %127 : vector<8x256xf32> to vector<8x256xbf16>
    %c40 = arith.constant 40 : index
    %c0_28 = arith.constant 0 : index
    %129 = vector.load %arg5[%c40, %c0_28] : memref<80x256xbf16, #tpu.memory_space<vmem>>, vector<8x256xbf16>
    tpu.vector_store %arg5[%c40, %c0_28], %128 {strides = array<i32>} : memref<80x256xbf16, #tpu.memory_space<vmem>>, vector<8x256xbf16>,
    %130 = vector.broadcast %1 : vector<1x156xi32> to vector<8x156xi32>
    %131 = vector.broadcast %122 : vector<8x1xi32> to vector<8x156xi32>
    %132 = arith.cmpi eq, %130, %131 : vector<8x156xi32>
    %cst_29 = arith.constant 0xFF800000 : f32
    %133 = vector.broadcast %cst_29 : f32 to vector<8x156xf32>
    %134 = arith.select %132, %133, %112 : vector<8x156xi1>, vector<8x156xf32>
    %cst_30 = arith.constant dense<0xFF800000> : vector<8xf32>
    %135 = vector.multi_reduction <maximumf>, %134, %cst_30 [1] : vector<8x156xf32> to vector<8xf32>
    %136 = vector.shape_cast %135 : vector<8xf32> to vector<8x1xf32>
    %137 = vector.broadcast %136 : vector<8x1xf32> to vector<8x156xf32>
    %138 = arith.cmpf oeq, %134, %137 : vector<8x156xf32>
    %c156_i32_31 = arith.constant 156 : i32
    %139 = vector.shape_cast %1 : vector<1x156xi32> to vector<1x156xi32>
    %140 = vector.broadcast %139 : vector<1x156xi32> to vector<8x156xi32>
    %141 = vector.broadcast %c156_i32_31 : i32 to vector<8x156xi32>
    %142 = arith.select %138, %140, %141 : vector<8x156xi1>, vector<8x156xi32>
    %cst_32 = arith.constant dense<2147483647> : vector<8xi32>
    %143 = vector.multi_reduction <minsi>, %142, %cst_32 [1] : vector<8x156xi32> to vector<8xi32>
    %144 = vector.shape_cast %143 : vector<8xi32> to vector<8x1xi32>
    %145 = vector.broadcast %2 : vector<1x256xi32> to vector<8x256xi32>
    %146 = vector.broadcast %144 : vector<8x1xi32> to vector<8x256xi32>
    %147 = arith.cmpi eq, %145, %146 : vector<8x256xi32>
    %148 = arith.extui %147 : vector<8x256xi1> to vector<8x256xi32>
    %149 = arith.sitofp %148 : vector<8x256xi32> to vector<8x256xf32>
    %150 = arith.truncf %149 : vector<8x256xf32> to vector<8x256xbf16>
    %c48 = arith.constant 48 : index
    %c0_33 = arith.constant 0 : index
    %151 = vector.load %arg5[%c48, %c0_33] : memref<80x256xbf16, #tpu.memory_space<vmem>>, vector<8x256xbf16>
    tpu.vector_store %arg5[%c48, %c0_33], %150 {strides = array<i32>} : memref<80x256xbf16, #tpu.memory_space<vmem>>, vector<8x256xbf16>,
    %152 = vector.broadcast %1 : vector<1x156xi32> to vector<8x156xi32>
    %153 = vector.broadcast %144 : vector<8x1xi32> to vector<8x156xi32>
    %154 = arith.cmpi eq, %152, %153 : vector<8x156xi32>
    %cst_34 = arith.constant 0xFF800000 : f32
    %155 = vector.broadcast %cst_34 : f32 to vector<8x156xf32>
    %156 = arith.select %154, %155, %134 : vector<8x156xi1>, vector<8x156xf32>
    %cst_35 = arith.constant dense<0xFF800000> : vector<8xf32>
    %157 = vector.multi_reduction <maximumf>, %156, %cst_35 [1] : vector<8x156xf32> to vector<8xf32>
    %158 = vector.shape_cast %157 : vector<8xf32> to vector<8x1xf32>
    %159 = vector.broadcast %158 : vector<8x1xf32> to vector<8x156xf32>
    %160 = arith.cmpf oeq, %156, %159 : vector<8x156xf32>
    %c156_i32_36 = arith.constant 156 : i32
    %161 = vector.shape_cast %1 : vector<1x156xi32> to vector<1x156xi32>
    %162 = vector.broadcast %161 : vector<1x156xi32> to vector<8x156xi32>
    %163 = vector.broadcast %c156_i32_36 : i32 to vector<8x156xi32>
    %164 = arith.select %160, %162, %163 : vector<8x156xi1>, vector<8x156xi32>
    %cst_37 = arith.constant dense<2147483647> : vector<8xi32>
    %165 = vector.multi_reduction <minsi>, %164, %cst_37 [1] : vector<8x156xi32> to vector<8xi32>
    %166 = vector.shape_cast %165 : vector<8xi32> to vector<8x1xi32>
    %167 = vector.broadcast %2 : vector<1x256xi32> to vector<8x256xi32>
    %168 = vector.broadcast %166 : vector<8x1xi32> to vector<8x256xi32>
    %169 = arith.cmpi eq, %167, %168 : vector<8x256xi32>
    %170 = arith.extui %169 : vector<8x256xi1> to vector<8x256xi32>
    %171 = arith.sitofp %170 : vector<8x256xi32> to vector<8x256xf32>
    %172 = arith.truncf %171 : vector<8x256xf32> to vector<8x256xbf16>
    %c56 = arith.constant 56 : index
    %c0_38 = arith.constant 0 : index
    %173 = vector.load %arg5[%c56, %c0_38] : memref<80x256xbf16, #tpu.memory_space<vmem>>, vector<8x256xbf16>
    tpu.vector_store %arg5[%c56, %c0_38], %172 {strides = array<i32>} : memref<80x256xbf16, #tpu.memory_space<vmem>>, vector<8x256xbf16>,
    %174 = vector.broadcast %1 : vector<1x156xi32> to vector<8x156xi32>
    %175 = vector.broadcast %166 : vector<8x1xi32> to vector<8x156xi32>
    %176 = arith.cmpi eq, %174, %175 : vector<8x156xi32>
    %cst_39 = arith.constant 0xFF800000 : f32
    %177 = vector.broadcast %cst_39 : f32 to vector<8x156xf32>
    %178 = arith.select %176, %177, %156 : vector<8x156xi1>, vector<8x156xf32>
    %cst_40 = arith.constant dense<0xFF800000> : vector<8xf32>
    %179 = vector.multi_reduction <maximumf>, %178, %cst_40 [1] : vector<8x156xf32> to vector<8xf32>
    %180 = vector.shape_cast %179 : vector<8xf32> to vector<8x1xf32>
    %181 = vector.broadcast %180 : vector<8x1xf32> to vector<8x156xf32>
    %182 = arith.cmpf oeq, %178, %181 : vector<8x156xf32>
    %c156_i32_41 = arith.constant 156 : i32
    %183 = vector.shape_cast %1 : vector<1x156xi32> to vector<1x156xi32>
    %184 = vector.broadcast %183 : vector<1x156xi32> to vector<8x156xi32>
    %185 = vector.broadcast %c156_i32_41 : i32 to vector<8x156xi32>
    %186 = arith.select %182, %184, %185 : vector<8x156xi1>, vector<8x156xi32>
    %cst_42 = arith.constant dense<2147483647> : vector<8xi32>
    %187 = vector.multi_reduction <minsi>, %186, %cst_42 [1] : vector<8x156xi32> to vector<8xi32>
    %188 = vector.shape_cast %187 : vector<8xi32> to vector<8x1xi32>
    %189 = vector.broadcast %2 : vector<1x256xi32> to vector<8x256xi32>
    %190 = vector.broadcast %188 : vector<8x1xi32> to vector<8x256xi32>
    %191 = arith.cmpi eq, %189, %190 : vector<8x256xi32>
    %192 = arith.extui %191 : vector<8x256xi1> to vector<8x256xi32>
    %193 = arith.sitofp %192 : vector<8x256xi32> to vector<8x256xf32>
    %194 = arith.truncf %193 : vector<8x256xf32> to vector<8x256xbf16>
    %c64 = arith.constant 64 : index
    %c0_43 = arith.constant 0 : index
    %195 = vector.load %arg5[%c64, %c0_43] : memref<80x256xbf16, #tpu.memory_space<vmem>>, vector<8x256xbf16>
    tpu.vector_store %arg5[%c64, %c0_43], %194 {strides = array<i32>} : memref<80x256xbf16, #tpu.memory_space<vmem>>, vector<8x256xbf16>,
    %196 = vector.broadcast %1 : vector<1x156xi32> to vector<8x156xi32>
    %197 = vector.broadcast %188 : vector<8x1xi32> to vector<8x156xi32>
    %198 = arith.cmpi eq, %196, %197 : vector<8x156xi32>
    %cst_44 = arith.constant 0xFF800000 : f32
    %199 = vector.broadcast %cst_44 : f32 to vector<8x156xf32>
    %200 = arith.select %198, %199, %178 : vector<8x156xi1>, vector<8x156xf32>
    %cst_45 = arith.constant dense<0xFF800000> : vector<8xf32>
    %201 = vector.multi_reduction <maximumf>, %200, %cst_45 [1] : vector<8x156xf32> to vector<8xf32>
    %202 = vector.shape_cast %201 : vector<8xf32> to vector<8x1xf32>
    %203 = vector.broadcast %202 : vector<8x1xf32> to vector<8x156xf32>
    %204 = arith.cmpf oeq, %200, %203 : vector<8x156xf32>
    %c156_i32_46 = arith.constant 156 : i32
    %205 = vector.shape_cast %1 : vector<1x156xi32> to vector<1x156xi32>
    %206 = vector.broadcast %205 : vector<1x156xi32> to vector<8x156xi32>
    %207 = vector.broadcast %c156_i32_46 : i32 to vector<8x156xi32>
    %208 = arith.select %204, %206, %207 : vector<8x156xi1>, vector<8x156xi32>
    %cst_47 = arith.constant dense<2147483647> : vector<8xi32>
    %209 = vector.multi_reduction <minsi>, %208, %cst_47 [1] : vector<8x156xi32> to vector<8xi32>
    %210 = vector.shape_cast %209 : vector<8xi32> to vector<8x1xi32>
    %211 = vector.broadcast %2 : vector<1x256xi32> to vector<8x256xi32>
    %212 = vector.broadcast %210 : vector<8x1xi32> to vector<8x256xi32>
    %213 = arith.cmpi eq, %211, %212 : vector<8x256xi32>
    %214 = arith.extui %213 : vector<8x256xi1> to vector<8x256xi32>
    %215 = arith.sitofp %214 : vector<8x256xi32> to vector<8x256xf32>
    %216 = arith.truncf %215 : vector<8x256xf32> to vector<8x256xbf16>
    %c72 = arith.constant 72 : index
    %c0_48 = arith.constant 0 : index
    %217 = vector.load %arg5[%c72, %c0_48] : memref<80x256xbf16, #tpu.memory_space<vmem>>, vector<8x256xbf16>
    tpu.vector_store %arg5[%c72, %c0_48], %216 {strides = array<i32>} : memref<80x256xbf16, #tpu.memory_space<vmem>>, vector<8x256xbf16>,
    %c0_49 = arith.constant 0 : index
    %c0_50 = arith.constant 0 : index
    %218 = vector.load %arg5[%c0_49, %c0_50] : memref<80x256xbf16, #tpu.memory_space<vmem>>, vector<80x256xbf16>
    %c0_51 = arith.constant 0 : index
    %c0_52 = arith.constant 0 : index
    %219 = vector.load %arg2[%c0_51, %c0_52] : memref<256x512xbf16, #tpu.memory_space<vmem>>, vector<256x512xbf16>
    %cst_53 = arith.constant dense<0.000000e+00> : vector<80x512xf32>
    %220 = tpu.matmul %218, %219, %cst_53 {dimension_numbers = #tpu.dot_dimension_numbers<[1], [0], [0], [1], [0, 0, 1, 1], [], []>} : vector<80x256xbf16>, vector<256x512xbf16>, vector<80x512xf32> -> vector<80x512xf32>
    %c0_54 = arith.constant 0 : index
    %c0_55 = arith.constant 0 : index
    %221 = vector.load %arg3[%c0_54, %c0_55] : memref<256x512xbf16, #tpu.memory_space<vmem>>, vector<256x512xbf16>
    %cst_56 = arith.constant dense<0.000000e+00> : vector<80x512xf32>
    %222 = tpu.matmul %218, %221, %cst_56 {dimension_numbers = #tpu.dot_dimension_numbers<[1], [0], [0], [1], [0, 0, 1, 1], [], []>} : vector<80x256xbf16>, vector<256x512xbf16>, vector<80x512xf32> -> vector<80x512xf32>
    %223 = arith.addf %220, %222 : vector<80x512xf32>
    %224 = vector.extract_strided_slice %223 {offsets = [0, 0], sizes = [8, 512], strides = [1, 1]} : vector<80x512xf32> to vector<8x512xf32>
    %c0_57 = arith.constant 0 : index
    %c0_58 = arith.constant 0 : index
    %225 = vector.load %arg4[%c0_57, %c0_58] : memref<8x5120xf32, #tpu.memory_space<vmem>>, vector<8x512xf32>
    tpu.vector_store %arg4[%c0_57, %c0_58], %224 {strides = array<i32>} : memref<8x5120xf32, #tpu.memory_space<vmem>>, vector<8x512xf32>,
    %226 = vector.extract_strided_slice %223 {offsets = [8, 0], sizes = [8, 512], strides = [1, 1]} : vector<80x512xf32> to vector<8x512xf32>
    %c0_59 = arith.constant 0 : index
    %c512 = arith.constant 512 : index
    %227 = vector.load %arg4[%c0_59, %c512] : memref<8x5120xf32, #tpu.memory_space<vmem>>, vector<8x512xf32>
    tpu.vector_store %arg4[%c0_59, %c512], %226 {strides = array<i32>} : memref<8x5120xf32, #tpu.memory_space<vmem>>, vector<8x512xf32>,
    %228 = vector.extract_strided_slice %223 {offsets = [16, 0], sizes = [8, 512], strides = [1, 1]} : vector<80x512xf32> to vector<8x512xf32>
    %c0_60 = arith.constant 0 : index
    %c1024 = arith.constant 1024 : index
    %229 = vector.load %arg4[%c0_60, %c1024] : memref<8x5120xf32, #tpu.memory_space<vmem>>, vector<8x512xf32>
    tpu.vector_store %arg4[%c0_60, %c1024], %228 {strides = array<i32>} : memref<8x5120xf32, #tpu.memory_space<vmem>>, vector<8x512xf32>,
    %230 = vector.extract_strided_slice %223 {offsets = [24, 0], sizes = [8, 512], strides = [1, 1]} : vector<80x512xf32> to vector<8x512xf32>
    %c0_61 = arith.constant 0 : index
    %c1536 = arith.constant 1536 : index
    %231 = vector.load %arg4[%c0_61, %c1536] : memref<8x5120xf32, #tpu.memory_space<vmem>>, vector<8x512xf32>
    tpu.vector_store %arg4[%c0_61, %c1536], %230 {strides = array<i32>} : memref<8x5120xf32, #tpu.memory_space<vmem>>, vector<8x512xf32>,
    %232 = vector.extract_strided_slice %223 {offsets = [32, 0], sizes = [8, 512], strides = [1, 1]} : vector<80x512xf32> to vector<8x512xf32>
    %c0_62 = arith.constant 0 : index
    %c2048 = arith.constant 2048 : index
    %233 = vector.load %arg4[%c0_62, %c2048] : memref<8x5120xf32, #tpu.memory_space<vmem>>, vector<8x512xf32>
    tpu.vector_store %arg4[%c0_62, %c2048], %232 {strides = array<i32>} : memref<8x5120xf32, #tpu.memory_space<vmem>>, vector<8x512xf32>,
    %234 = vector.extract_strided_slice %223 {offsets = [40, 0], sizes = [8, 512], strides = [1, 1]} : vector<80x512xf32> to vector<8x512xf32>
    %c0_63 = arith.constant 0 : index
    %c2560 = arith.constant 2560 : index
    %235 = vector.load %arg4[%c0_63, %c2560] : memref<8x5120xf32, #tpu.memory_space<vmem>>, vector<8x512xf32>
    tpu.vector_store %arg4[%c0_63, %c2560], %234 {strides = array<i32>} : memref<8x5120xf32, #tpu.memory_space<vmem>>, vector<8x512xf32>,
    %236 = vector.extract_strided_slice %223 {offsets = [48, 0], sizes = [8, 512], strides = [1, 1]} : vector<80x512xf32> to vector<8x512xf32>
    %c0_64 = arith.constant 0 : index
    %c3072 = arith.constant 3072 : index
    %237 = vector.load %arg4[%c0_64, %c3072] : memref<8x5120xf32, #tpu.memory_space<vmem>>, vector<8x512xf32>
    tpu.vector_store %arg4[%c0_64, %c3072], %236 {strides = array<i32>} : memref<8x5120xf32, #tpu.memory_space<vmem>>, vector<8x512xf32>,
    %238 = vector.extract_strided_slice %223 {offsets = [56, 0], sizes = [8, 512], strides = [1, 1]} : vector<80x512xf32> to vector<8x512xf32>
    %c0_65 = arith.constant 0 : index
    %c3584 = arith.constant 3584 : index
    %239 = vector.load %arg4[%c0_65, %c3584] : memref<8x5120xf32, #tpu.memory_space<vmem>>, vector<8x512xf32>
    tpu.vector_store %arg4[%c0_65, %c3584], %238 {strides = array<i32>} : memref<8x5120xf32, #tpu.memory_space<vmem>>, vector<8x512xf32>,
    %240 = vector.extract_strided_slice %223 {offsets = [64, 0], sizes = [8, 512], strides = [1, 1]} : vector<80x512xf32> to vector<8x512xf32>
    %c0_66 = arith.constant 0 : index
    %c4096 = arith.constant 4096 : index
    %241 = vector.load %arg4[%c0_66, %c4096] : memref<8x5120xf32, #tpu.memory_space<vmem>>, vector<8x512xf32>
    tpu.vector_store %arg4[%c0_66, %c4096], %240 {strides = array<i32>} : memref<8x5120xf32, #tpu.memory_space<vmem>>, vector<8x512xf32>,
    %242 = vector.extract_strided_slice %223 {offsets = [72, 0], sizes = [8, 512], strides = [1, 1]} : vector<80x512xf32> to vector<8x512xf32>
    %c0_67 = arith.constant 0 : index
    %c4608 = arith.constant 4608 : index
    %243 = vector.load %arg4[%c0_67, %c4608] : memref<8x5120xf32, #tpu.memory_space<vmem>>, vector<8x512xf32>
    tpu.vector_store %arg4[%c0_67, %c4608], %242 {strides = array<i32>} : memref<8x5120xf32, #tpu.memory_space<vmem>>, vector<8x512xf32>,
    return
  }
  func.func @transform_0(%arg0: i32) -> (i32, i32) {
    %c0_i32 = arith.constant 0 : i32
    %c0_i32_0 = arith.constant 0 : i32
    return %arg0, %c0_i32 : i32, i32
  }
  func.func @transform_1(%arg0: i32) -> (i32, i32) {
    %c0_i32 = arith.constant 0 : i32
    %c0_i32_0 = arith.constant 0 : i32
    %c0_i32_1 = arith.constant 0 : i32
    return %c0_i32, %c0_i32_0 : i32, i32
  }
  func.func @transform_2(%arg0: i32) -> (i32, i32) {
    %c0_i32 = arith.constant 0 : i32
    %c0_i32_0 = arith.constant 0 : i32
    %c0_i32_1 = arith.constant 0 : i32
    return %c0_i32, %c0_i32_0 : i32, i32
  }
  func.func @transform_3(%arg0: i32) -> (i32, i32) {
    %c0_i32 = arith.constant 0 : i32
    %c0_i32_0 = arith.constant 0 : i32
    return %arg0, %c0_i32 : i32, i32
  }
}

</mosaic_0001>

<llo_original>
// kernel: tpu_custom_call.1
$region0: #{tpu_custom_call.1}
  #allocation0 [shape = 'u32[]', space=smem, size = 0x4, offset = 0x4, fixed_abs, tag = 'smem constant byte address 0x4 - core index']
  #allocation1 [shape = 'u32[144,128]{1,0:T(1,128)}', space=vmem, size = 0x12000, scoped, tag = 'internal scratch']
  #allocation2 [shape = 'bf16[80,256]{1,0:T(16,128)(2,1)}', space=vmem, size = 0xa000, scoped, tag = 'scratch operand']
  %s0 = inlined_call_operand.hbm [shape: f32[8,156], index: 0, kind: input, shape index: {}]
  %s1 = inlined_call_operand.hbm [shape: bf16[256,512], index: 1, kind: input, shape index: {}]
  %s2 = inlined_call_operand.hbm [shape: bf16[256,512], index: 2, kind: input, shape index: {}]
  %s3 = inlined_call_operand.hbm [shape: f32[8,5120], index: 3, kind: output, shape index: {}]
  %s4 = sld [smem:[#allocation0]]
  $region34: #{tpu_custom_call.1} parent=0
    _
  %s6 = ssub.s32 1, %s4
  %s7 = scalar_select 0, %s6, %s4
  $region1: #{tpu_custom_call.1} parent=0
    #allocation3 [shape = 'u8[8192]{0}', space=vmem, size = 0x2000, scoped, tag = 'input window, operand 0, single buffered']
    #allocation4 [shape = 's32[1]{0}', space=sflag, size = 0x4, scoped, tag = 'scoped memory for tpu_custom_call.1']
    #allocation5 [shape = 's32[1]{0}', space=sflag, size = 0x4, scoped, tag = 'scoped memory for tpu_custom_call.1']
    #allocation6 [shape = 'u8[262144]{0}', space=vmem, size = 0x40000, scoped, tag = 'input window, operand 1, single buffered']
    #allocation7 [shape = 's32[1]{0}', space=sflag, size = 0x4, scoped, tag = 'scoped memory for tpu_custom_call.1']
    #allocation8 [shape = 'u8[262144]{0}', space=vmem, size = 0x40000, scoped, tag = 'input window, operand 2, single buffered']
    #allocation9 [shape = 'u8[163840]{0}', space=vmem, size = 0x28000, scoped, tag = 'output window, operand 0, single buffered']
    %8 = vsyncpa [#allocation4], 0
    %9 = vsyncpa [#allocation7], 0
    %10 = vsyncpa [#allocation5], 0
    // Predicated region
    $region2: #{tpu_custom_call.1} parent=1 // pred_check
      _
    $region3: #{tpu_custom_call.1} parent=1 // pred_check_branch
      %12 = sbr.rel (0) target = $region5
    $region4: #{tpu_custom_call.1} parent=1 // pred_region
      %s14 = ssub.s32 256, 256
      %15 = vsyncadd [#allocation4], %s14
      %s17 = sshll.u32 [#allocation3], 4
      %s18 = int_to_ptr.vmem [resolvable:$true] %s17
      %20 = dma.hbm_to_vmem [thread:$0]  %s0, 256, %s18, [#allocation4]
    $region5: #{tpu_custom_call.1} parent=1 // pred_fallthru
      _
    // Predicated region
    $region6: #{tpu_custom_call.1} parent=1 // pred_check
      _
    $region7: #{tpu_custom_call.1} parent=1 // pred_check_branch
      %22 = sbr.rel (0) target = $region9
    $region8: #{tpu_custom_call.1} parent=1 // pred_region
      %s24 = ssub.s32 8192, 8192
      %25 = vsyncadd [#allocation7], %s24
      %s26 = sshll.u32 [#allocation6], 4
      %s27 = int_to_ptr.vmem [resolvable:$true] %s26
      %32 = dma.hbm_to_vmem [thread:$0]  %s1, 8192, %s27, [#allocation7], 256, 256, 16
    $region9: #{tpu_custom_call.1} parent=1 // pred_fallthru
      _
    // Predicated region
    $region10: #{tpu_custom_call.1} parent=1 // pred_check
      _
    $region11: #{tpu_custom_call.1} parent=1 // pred_check_branch
      %34 = sbr.rel (0) target = $region13
    $region12: #{tpu_custom_call.1} parent=1 // pred_region
      %s36 = ssub.s32 8192, 8192
      %37 = vsyncadd [#allocation7], %s36
      %s38 = sshll.u32 [#allocation8], 4
      %s39 = int_to_ptr.vmem [resolvable:$true] %s38
      %44 = dma.hbm_to_vmem [thread:$0]  %s2, 8192, %s39, [#allocation7], 256, 256, 16
    $region13: #{tpu_custom_call.1} parent=1 // pred_fallthru
      _
    // Predicated region
    $region14: #{tpu_custom_call.1} parent=1 // pred_check
      _
    $region15: #{tpu_custom_call.1} parent=1 // pred_check_branch
      %46 = sbr.rel (0) target = $region17
    $region16: #{tpu_custom_call.1} parent=1 // pred_region
      %47 = dma.done [#allocation4], 256
    $region17: #{tpu_custom_call.1} parent=1 // pred_fallthru
      _
    // Predicated region
    $region18: #{tpu_custom_call.1} parent=1 // pred_check
      _
    $region19: #{tpu_custom_call.1} parent=1 // pred_check_branch
      %49 = sbr.rel (0) target = $region21
    $region20: #{tpu_custom_call.1} parent=1 // pred_region
      %50 = dma.done [#allocation7], 8192
    $region21: #{tpu_custom_call.1} parent=1 // pred_fallthru
      _
    // Predicated region
    $region22: #{tpu_custom_call.1} parent=1 // pred_check
      _
    $region23: #{tpu_custom_call.1} parent=1 // pred_check_branch
      %52 = sbr.rel (0) target = $region25
    $region24: #{tpu_custom_call.1} parent=1 // pred_region
      %53 = dma.done [#allocation7], 8192
    $region25: #{tpu_custom_call.1} parent=1 // pred_fallthru
      _
    %v54 = vld [vmem:[#allocation3] sm:$0xff]
    %v55 = vld [vmem:[#allocation3 + $0x8] sm:$0xff]
    %v56 = vlaneseq
    %v57 = vand.u32 %v56, 127
    %v58 = vadd.s32 %v57, 128
    %vm59 = vcmask 228352
    %v60 = vsel %vm59, %v55, -inf
    %v61 = vmax.f32 %v54, %v60
    %62 = vmax.xlane.f32.xlu0 %v61
    %v63 = vpop.xlane.xlu0 %62
    %vm64 = vcmp.eq.f32.partialorder %v54, %v63
    %vm65 = vcmp.eq.f32.partialorder %v55, %v63
    %v66 = vsel %vm64, %v57, 156
    %v67 = vsel %vm65, %v58, 156
    %v68 = vsel %vm59, %v67, 2147483647
    %vm69 = vcmp.lt.s32.totalorder %v66, %v68
    %v70 = vsel %vm69, %v66, %v68
    %v71 = vand.u32 %v70, 65535
    %v72 = vshra.s32 %v70, 16
    %v73 = vcvt.s32.f32 %v71
    %v74 = vcvt.s32.f32 %v72
    %75 = vmin.xlane.f32.xlu0 %v74
    %v76 = vpop.xlane.xlu0 %75
    %vm77 = vcmp.eq.f32.partialorder %v74, %v76
    %v78 = vsel %vm77, %v73, inf
    %79 = vmin.xlane.f32.xlu0 %v78
    %v80 = vpop.xlane.xlu0 %79
    %v81 = vcvt.f32.s32 %v80
    %v82 = vcvt.f32.s32 %v76
    %v83 = vshll.u32 %v82, 16
    %v84 = vadd.s32 %v83, %v81
    %vm85 = vcmp.eq.s32.totalorder %v57, %v84
    %vm86 = vcmp.eq.s32.totalorder %v58, %v84
    %v87 = vsel %vm85, 1, 0
    %v88 = vsel %vm86, 1, 0
    %v89 = vcvt.s32.f32 %v87
    %v90 = vcvt.s32.f32 %v88
    %v91 = vpack.c.bf16 %v89, %v89
    %v92 = vpack.c.bf16 %v90, %v90
    %93 = vst [vmem:[#allocation2] sm:$0xf] %v91
    %94 = vst [vmem:[#allocation2 + $0x8] sm:$0xf] %v92
    %v95 = vsel %vm85, -inf, %v54
    %v96 = vsel %vm86, -inf, %v55
    %v97 = vsel %vm59, %v96, -inf
    %v98 = vmax.f32 %v95, %v97
    %99 = vmax.xlane.f32.xlu0 %v98
    %v100 = vpop.xlane.xlu0 %99
    %vm101 = vcmp.eq.f32.partialorder %v95, %v100
    %vm102 = vcmp.eq.f32.partialorder %v96, %v100
    %v103 = vsel %vm101, %v57, 156
    %v104 = vsel %vm102, %v58, 156
    %v105 = vsel %vm59, %v104, 2147483647
    %vm106 = vcmp.lt.s32.totalorder %v103, %v105
    %v107 = vsel %vm106, %v103, %v105
    %v108 = vand.u32 %v107, 65535
    %v109 = vshra.s32 %v107, 16
    %v110 = vcvt.s32.f32 %v108
    %v111 = vcvt.s32.f32 %v109
    %112 = vmin.xlane.f32.xlu0 %v111
    %v113 = vpop.xlane.xlu0 %112
    %vm114 = vcmp.eq.f32.partialorder %v111, %v113
    %v115 = vsel %vm114, %v110, inf
    %116 = vmin.xlane.f32.xlu0 %v115
    %v117 = vpop.xlane.xlu0 %116
    %v118 = vcvt.f32.s32 %v117
    %v119 = vcvt.f32.s32 %v113
    %v120 = vshll.u32 %v119, 16
    %v121 = vadd.s32 %v120, %v118
    %vm122 = vcmp.eq.s32.totalorder %v57, %v121
    %vm123 = vcmp.eq.s32.totalorder %v58, %v121
    %v124 = vsel %vm122, 1, 0
    %v125 = vsel %vm123, 1, 0
    %v126 = vcvt.s32.f32 %v124
    %v127 = vcvt.s32.f32 %v125
    %v128 = vpack.c.bf16 %v126, %v126
    %v129 = vpack.c.bf16 %v127, %v127
    %v132 = vrot.slane %v128, 4
    %v133 = vrot.slane %v129, 4
    %136 = vst [vmem:[#allocation2] sm:$0xf0] %v132
    %137 = vst [vmem:[#allocation2 + $0x8] sm:$0xf0] %v133
    %v138 = vsel %vm122, -inf, %v95
    %v139 = vsel %vm123, -inf, %v96
    %v140 = vsel %vm59, %v139, -inf
    %v141 = vmax.f32 %v138, %v140
    %142 = vmax.xlane.f32.xlu0 %v141
    %v143 = vpop.xlane.xlu0 %142
    %vm144 = vcmp.eq.f32.partialorder %v138, %v143
    %vm145 = vcmp.eq.f32.partialorder %v139, %v143
    %v146 = vsel %vm144, %v57, 156
    %v147 = vsel %vm145, %v58, 156
    %v148 = vsel %vm59, %v147, 2147483647
    %vm149 = vcmp.lt.s32.totalorder %v146, %v148
    %v150 = vsel %vm149, %v146, %v148
    %v151 = vand.u32 %v150, 65535
    %v152 = vshra.s32 %v150, 16
    %v153 = vcvt.s32.f32 %v151
    %v154 = vcvt.s32.f32 %v152
    %155 = vmin.xlane.f32.xlu0 %v154
    %v156 = vpop.xlane.xlu0 %155
    %vm157 = vcmp.eq.f32.partialorder %v154, %v156
    %v158 = vsel %vm157, %v153, inf
    %159 = vmin.xlane.f32.xlu0 %v158
    %v160 = vpop.xlane.xlu0 %159
    %v161 = vcvt.f32.s32 %v160
    %v162 = vcvt.f32.s32 %v156
    %v163 = vshll.u32 %v162, 16
    %v164 = vadd.s32 %v163, %v161
    %vm165 = vcmp.eq.s32.totalorder %v57, %v164
    %vm166 = vcmp.eq.s32.totalorder %v58, %v164
    %v167 = vsel %vm165, 1, 0
    %v168 = vsel %vm166, 1, 0
    %v169 = vcvt.s32.f32 %v167
    %v170 = vcvt.s32.f32 %v168
    %v171 = vpack.c.bf16 %v169, %v169
    %v172 = vpack.c.bf16 %v170, %v170
    %173 = vst [vmem:[#allocation2 + $0x10] sm:$0xf] %v171
    %174 = vst [vmem:[#allocation2 + $0x18] sm:$0xf] %v172
    %v175 = vsel %vm165, -inf, %v138
    %v176 = vsel %vm166, -inf, %v139
    %v177 = vsel %vm59, %v176, -inf
    %v178 = vmax.f32 %v175, %v177
    %179 = vmax.xlane.f32.xlu0 %v178
    %v180 = vpop.xlane.xlu0 %179
    %vm181 = vcmp.eq.f32.partialorder %v175, %v180
    %vm182 = vcmp.eq.f32.partialorder %v176, %v180
    %v183 = vsel %vm181, %v57, 156
    %v184 = vsel %vm182, %v58, 156
    %v185 = vsel %vm59, %v184, 2147483647
    %vm186 = vcmp.lt.s32.totalorder %v183, %v185
    %v187 = vsel %vm186, %v183, %v185
    %v188 = vand.u32 %v187, 65535
    %v189 = vshra.s32 %v187, 16
    %v190 = vcvt.s32.f32 %v188
    %v191 = vcvt.s32.f32 %v189
    %192 = vmin.xlane.f32.xlu0 %v191
    %v193 = vpop.xlane.xlu0 %192
    %vm194 = vcmp.eq.f32.partialorder %v191, %v193
    %v195 = vsel %vm194, %v190, inf
    %196 = vmin.xlane.f32.xlu0 %v195
    %v197 = vpop.xlane.xlu0 %196
    %v198 = vcvt.f32.s32 %v197
    %v199 = vcvt.f32.s32 %v193
    %v200 = vshll.u32 %v199, 16
    %v201 = vadd.s32 %v200, %v198
    %vm202 = vcmp.eq.s32.totalorder %v57, %v201
    %vm203 = vcmp.eq.s32.totalorder %v58, %v201
    %v204 = vsel %vm202, 1, 0
    %v205 = vsel %vm203, 1, 0
    %v206 = vcvt.s32.f32 %v204
    %v207 = vcvt.s32.f32 %v205
    %v208 = vpack.c.bf16 %v206, %v206
    %v209 = vpack.c.bf16 %v207, %v207
    %v212 = vrot.slane %v208, 4
    %v213 = vrot.slane %v209, 4
    %216 = vst [vmem:[#allocation2 + $0x10] sm:$0xf0] %v212
    %217 = vst [vmem:[#allocation2 + $0x18] sm:$0xf0] %v213
    %v218 = vsel %vm202, -inf, %v175
    %v219 = vsel %vm203, -inf, %v176
    %v220 = vsel %vm59, %v219, -inf
    %v221 = vmax.f32 %v218, %v220
    %222 = vmax.xlane.f32.xlu0 %v221
    %v223 = vpop.xlane.xlu0 %222
    %vm224 = vcmp.eq.f32.partialorder %v218, %v223
    %vm225 = vcmp.eq.f32.partialorder %v219, %v223
    %v226 = vsel %vm224, %v57, 156
    %v227 = vsel %vm225, %v58, 156
    %v228 = vsel %vm59, %v227, 2147483647
    %vm229 = vcmp.lt.s32.totalorder %v226, %v228
    %v230 = vsel %vm229, %v226, %v228
    %v231 = vand.u32 %v230, 65535
    %v232 = vshra.s32 %v230, 16
    %v233 = vcvt.s32.f32 %v231
    %v234 = vcvt.s32.f32 %v232
    %235 = vmin.xlane.f32.xlu0 %v234
    %v236 = vpop.xlane.xlu0 %235
    %vm237 = vcmp.eq.f32.partialorder %v234, %v236
    %v238 = vsel %vm237, %v233, inf
    %239 = vmin.xlane.f32.xlu0 %v238
    %v240 = vpop.xlane.xlu0 %239
    %v241 = vcvt.f32.s32 %v240
    %v242 = vcvt.f32.s32 %v236
    %v243 = vshll.u32 %v242, 16
    %v244 = vadd.s32 %v243, %v241
    %vm245 = vcmp.eq.s32.totalorder %v57, %v244
    %vm246 = vcmp.eq.s32.totalorder %v58, %v244
    %v247 = vsel %vm245, 1, 0
    %v248 = vsel %vm246, 1, 0
    %v249 = vcvt.s32.f32 %v247
    %v250 = vcvt.s32.f32 %v248
    %v251 = vpack.c.bf16 %v249, %v249
    %v252 = vpack.c.bf16 %v250, %v250
    %253 = vst [vmem:[#allocation2 + $0x20] sm:$0xf] %v251
    %254 = vst [vmem:[#allocation2 + $0x28] sm:$0xf] %v252
    %v255 = vsel %vm245, -inf, %v218
    %v256 = vsel %vm246, -inf, %v219
    %v257 = vsel %vm59, %v256, -inf
    %v258 = vmax.f32 %v255, %v257
    %259 = vmax.xlane.f32.xlu0 %v258
    %v260 = vpop.xlane.xlu0 %259
    %vm261 = vcmp.eq.f32.partialorder %v255, %v260
    %vm262 = vcmp.eq.f32.partialorder %v256, %v260
    %v263 = vsel %vm261, %v57, 156
    %v264 = vsel %vm262, %v58, 156
    %v265 = vsel %vm59, %v264, 2147483647
    %vm266 = vcmp.lt.s32.totalorder %v263, %v265
    %v267 = vsel %vm266, %v263, %v265
    %v268 = vand.u32 %v267, 65535
    %v269 = vshra.s32 %v267, 16
    %v270 = vcvt.s32.f32 %v268
    %v271 = vcvt.s32.f32 %v269
    %272 = vmin.xlane.f32.xlu0 %v271
    %v273 = vpop.xlane.xlu0 %272
    %vm274 = vcmp.eq.f32.partialorder %v271, %v273
    %v275 = vsel %vm274, %v270, inf
    %276 = vmin.xlane.f32.xlu0 %v275
    %v277 = vpop.xlane.xlu0 %276
    %v278 = vcvt.f32.s32 %v277
    %v279 = vcvt.f32.s32 %v273
    %v280 = vshll.u32 %v279, 16
    %v281 = vadd.s32 %v280, %v278
    %vm282 = vcmp.eq.s32.totalorder %v57, %v281
    %vm283 = vcmp.eq.s32.totalorder %v58, %v281
    %v284 = vsel %vm282, 1, 0
    %v285 = vsel %vm283, 1, 0
    %v286 = vcvt.s32.f32 %v284
    %v287 = vcvt.s32.f32 %v285
    %v288 = vpack.c.bf16 %v286, %v286
    %v289 = vpack.c.bf16 %v287, %v287
    %v292 = vrot.slane %v288, 4
    %v293 = vrot.slane %v289, 4
    %296 = vst [vmem:[#allocation2 + $0x20] sm:$0xf0] %v292
    %297 = vst [vmem:[#allocation2 + $0x28] sm:$0xf0] %v293
    %v298 = vsel %vm282, -inf, %v255
    %v299 = vsel %vm283, -inf, %v256
    %v300 = vsel %vm59, %v299, -inf
    %v301 = vmax.f32 %v298, %v300
    %302 = vmax.xlane.f32.xlu0 %v301
    %v303 = vpop.xlane.xlu0 %302
    %vm304 = vcmp.eq.f32.partialorder %v298, %v303
    %vm305 = vcmp.eq.f32.partialorder %v299, %v303
    %v306 = vsel %vm304, %v57, 156
    %v307 = vsel %vm305, %v58, 156
    %v308 = vsel %vm59, %v307, 2147483647
    %vm309 = vcmp.lt.s32.totalorder %v306, %v308
    %v310 = vsel %vm309, %v306, %v308
    %v311 = vand.u32 %v310, 65535
    %v312 = vshra.s32 %v310, 16
    %v313 = vcvt.s32.f32 %v311
    %v314 = vcvt.s32.f32 %v312
    %315 = vmin.xlane.f32.xlu0 %v314
    %v316 = vpop.xlane.xlu0 %315
    %vm317 = vcmp.eq.f32.partialorder %v314, %v316
    %v318 = vsel %vm317, %v313, inf
    %319 = vmin.xlane.f32.xlu0 %v318
    %v320 = vpop.xlane.xlu0 %319
    %v321 = vcvt.f32.s32 %v320
    %v322 = vcvt.f32.s32 %v316
    %v323 = vshll.u32 %v322, 16
    %v324 = vadd.s32 %v323, %v321
    %vm325 = vcmp.eq.s32.totalorder %v57, %v324
    %vm326 = vcmp.eq.s32.totalorder %v58, %v324
    %v327 = vsel %vm325, 1, 0
    %v328 = vsel %vm326, 1, 0
    %v329 = vcvt.s32.f32 %v327
    %v330 = vcvt.s32.f32 %v328
    %v331 = vpack.c.bf16 %v329, %v329
    %v332 = vpack.c.bf16 %v330, %v330
    %333 = vst [vmem:[#allocation2 + $0x30] sm:$0xf] %v331
    %334 = vst [vmem:[#allocation2 + $0x38] sm:$0xf] %v332
    %v335 = vsel %vm325, -inf, %v298
    %v336 = vsel %vm326, -inf, %v299
    %v337 = vsel %vm59, %v336, -inf
    %v338 = vmax.f32 %v335, %v337
    %339 = vmax.xlane.f32.xlu0 %v338
    %v340 = vpop.xlane.xlu0 %339
    %vm341 = vcmp.eq.f32.partialorder %v335, %v340
    %vm342 = vcmp.eq.f32.partialorder %v336, %v340
    %v343 = vsel %vm341, %v57, 156
    %v344 = vsel %vm342, %v58, 156
    %v345 = vsel %vm59, %v344, 2147483647
    %vm346 = vcmp.lt.s32.totalorder %v343, %v345
    %v347 = vsel %vm346, %v343, %v345
    %v348 = vand.u32 %v347, 65535
    %v349 = vshra.s32 %v347, 16
    %v350 = vcvt.s32.f32 %v348
    %v351 = vcvt.s32.f32 %v349
    %352 = vmin.xlane.f32.xlu0 %v351
    %v353 = vpop.xlane.xlu0 %352
    %vm354 = vcmp.eq.f32.partialorder %v351, %v353
    %v355 = vsel %vm354, %v350, inf
    %356 = vmin.xlane.f32.xlu0 %v355
    %v357 = vpop.xlane.xlu0 %356
    %v358 = vcvt.f32.s32 %v357
    %v359 = vcvt.f32.s32 %v353
    %v360 = vshll.u32 %v359, 16
    %v361 = vadd.s32 %v360, %v358
    %vm362 = vcmp.eq.s32.totalorder %v57, %v361
    %vm363 = vcmp.eq.s32.totalorder %v58, %v361
    %v364 = vsel %vm362, 1, 0
    %v365 = vsel %vm363, 1, 0
    %v366 = vcvt.s32.f32 %v364
    %v367 = vcvt.s32.f32 %v365
    %v368 = vpack.c.bf16 %v366, %v366
    %v369 = vpack.c.bf16 %v367, %v367
    %v372 = vrot.slane %v368, 4
    %v373 = vrot.slane %v369, 4
    %376 = vst [vmem:[#allocation2 + $0x30] sm:$0xf0] %v372
    %377 = vst [vmem:[#allocation2 + $0x38] sm:$0xf0] %v373
    %v378 = vsel %vm362, -inf, %v335
    %v379 = vsel %vm363, -inf, %v336
    %v380 = vsel %vm59, %v379, -inf
    %v381 = vmax.f32 %v378, %v380
    %382 = vmax.xlane.f32.xlu0 %v381
    %v383 = vpop.xlane.xlu0 %382
    %vm384 = vcmp.eq.f32.partialorder %v378, %v383
    %vm385 = vcmp.eq.f32.partialorder %v379, %v383
    %v386 = vsel %vm384, %v57, 156
    %v387 = vsel %vm385, %v58, 156
    %v388 = vsel %vm59, %v387, 2147483647
    %vm389 = vcmp.lt.s32.totalorder %v386, %v388
    %v390 = vsel %vm389, %v386, %v388
    %v391 = vand.u32 %v390, 65535
    %v392 = vshra.s32 %v390, 16
    %v393 = vcvt.s32.f32 %v391
    %v394 = vcvt.s32.f32 %v392
    %395 = vmin.xlane.f32.xlu0 %v394
    %v396 = vpop.xlane.xlu0 %395
    %vm397 = vcmp.eq.f32.partialorder %v394, %v396
    %v398 = vsel %vm397, %v393, inf
    %399 = vmin.xlane.f32.xlu0 %v398
    %v400 = vpop.xlane.xlu0 %399
    %v401 = vcvt.f32.s32 %v400
    %v402 = vcvt.f32.s32 %v396
    %v403 = vshll.u32 %v402, 16
    %v404 = vadd.s32 %v403, %v401
    %vm405 = vcmp.eq.s32.totalorder %v57, %v404
    %vm406 = vcmp.eq.s32.totalorder %v58, %v404
    %v407 = vsel %vm405, 1, 0
    %v408 = vsel %vm406, 1, 0
    %v409 = vcvt.s32.f32 %v407
    %v410 = vcvt.s32.f32 %v408
    %v411 = vpack.c.bf16 %v409, %v409
    %v412 = vpack.c.bf16 %v410, %v410
    %413 = vst [vmem:[#allocation2 + $0x40] sm:$0xf] %v411
    %414 = vst [vmem:[#allocation2 + $0x48] sm:$0xf] %v412
    %v415 = vsel %vm405, -inf, %v378
    %v416 = vsel %vm406, -inf, %v379
    %v417 = vsel %vm59, %v416, -inf
    %v418 = vmax.f32 %v415, %v417
    %419 = vmax.xlane.f32.xlu0 %v418
    %v420 = vpop.xlane.xlu0 %419
    %vm421 = vcmp.eq.f32.partialorder %v415, %v420
    %vm422 = vcmp.eq.f32.partialorder %v416, %v420
    %v423 = vsel %vm421, %v57, 156
    %v424 = vsel %vm422, %v58, 156
    %v425 = vsel %vm59, %v424, 2147483647
    %vm426 = vcmp.lt.s32.totalorder %v423, %v425
    %v427 = vsel %vm426, %v423, %v425
    %v428 = vand.u32 %v427, 65535
    %v429 = vshra.s32 %v427, 16
    %v430 = vcvt.s32.f32 %v428
    %v431 = vcvt.s32.f32 %v429
    %432 = vmin.xlane.f32.xlu0 %v431
    %v433 = vpop.xlane.xlu0 %432
    %vm434 = vcmp.eq.f32.partialorder %v431, %v433
    %v435 = vsel %vm434, %v430, inf
    %436 = vmin.xlane.f32.xlu0 %v435
    %v437 = vpop.xlane.xlu0 %436
    %v438 = vcvt.f32.s32 %v437
    %v439 = vcvt.f32.s32 %v433
    %v440 = vshll.u32 %v439, 16
    %v441 = vadd.s32 %v440, %v438
    %vm442 = vcmp.eq.s32.totalorder %v57, %v441
    %vm443 = vcmp.eq.s32.totalorder %v58, %v441
    %v444 = vsel %vm442, 1, 0
    %v445 = vsel %vm443, 1, 0
    %v446 = vcvt.s32.f32 %v444
    %v447 = vcvt.s32.f32 %v445
    %v448 = vpack.c.bf16 %v446, %v446
    %v449 = vpack.c.bf16 %v447, %v447
    %v452 = vrot.slane %v448, 4
    %v453 = vrot.slane %v449, 4
    %456 = vst [vmem:[#allocation2 + $0x40] sm:$0xf0] %v452
    %457 = vst [vmem:[#allocation2 + $0x48] sm:$0xf0] %v453
    %v458 = vld [vmem:[#allocation2] sm:$0xff]
    %v459 = vld [vmem:[#allocation2 + $0x8] sm:$0xff]
    %v460 = vld [vmem:[#allocation2 + $0x10] sm:$0xff]
    %v461 = vld [vmem:[#allocation2 + $0x18] sm:$0xff]
    %v462 = vld [vmem:[#allocation2 + $0x20] sm:$0xff]
    %v463 = vld [vmem:[#allocation2 + $0x28] sm:$0xff]
    %v464 = vld [vmem:[#allocation2 + $0x30] sm:$0xff]
    %v465 = vld [vmem:[#allocation2 + $0x38] sm:$0xff]
    %v466 = vld [vmem:[#allocation2 + $0x40] sm:$0xff]
    %v467 = vld [vmem:[#allocation2 + $0x48] sm:$0xff]
    %v468 = vld [vmem:[#allocation6] sm:$0xff]
    %v469 = vld [vmem:[#allocation6 + $0x8] sm:$0xff]
    %v470 = vld [vmem:[#allocation6 + $0x10] sm:$0xff]
    %v471 = vld [vmem:[#allocation6 + $0x18] sm:$0xff]
    %v472 = vld [vmem:[#allocation6 + $0x20] sm:$0xff]
    %v473 = vld [vmem:[#allocation6 + $0x28] sm:$0xff]
    %v474 = vld [vmem:[#allocation6 + $0x30] sm:$0xff]
    %v475 = vld [vmem:[#allocation6 + $0x38] sm:$0xff]
    %v476 = vld [vmem:[#allocation6 + $0x40] sm:$0xff]
    %v477 = vld [vmem:[#allocation6 + $0x48] sm:$0xff]
    %v478 = vld [vmem:[#allocation6 + $0x50] sm:$0xff]
    %v479 = vld [vmem:[#allocation6 + $0x58] sm:$0xff]
    %v480 = vld [vmem:[#allocation6 + $0x60] sm:$0xff]
    %v481 = vld [vmem:[#allocation6 + $0x68] sm:$0xff]
    %v482 = vld [vmem:[#allocation6 + $0x70] sm:$0xff]
    %v483 = vld [vmem:[#allocation6 + $0x78] sm:$0xff]
    %v484 = vld [vmem:[#allocation6 + $0x80] sm:$0xff]
    %v485 = vld [vmem:[#allocation6 + $0x88] sm:$0xff]
    %v486 = vld [vmem:[#allocation6 + $0x90] sm:$0xff]
    %v487 = vld [vmem:[#allocation6 + $0x98] sm:$0xff]
    %v488 = vld [vmem:[#allocation6 + $0xa0] sm:$0xff]
    %v489 = vld [vmem:[#allocation6 + $0xa8] sm:$0xff]
    %v490 = vld [vmem:[#allocation6 + $0xb0] sm:$0xff]
    %v491 = vld [vmem:[#allocation6 + $0xb8] sm:$0xff]
    %v492 = vld [vmem:[#allocation6 + $0xc0] sm:$0xff]
    %v493 = vld [vmem:[#allocation6 + $0xc8] sm:$0xff]
    %v494 = vld [vmem:[#allocation6 + $0xd0] sm:$0xff]
    %v495 = vld [vmem:[#allocation6 + $0xd8] sm:$0xff]
    %v496 = vld [vmem:[#allocation6 + $0xe0] sm:$0xff]
    %v497 = vld [vmem:[#allocation6 + $0xe8] sm:$0xff]
    %v498 = vld [vmem:[#allocation6 + $0xf0] sm:$0xff]
    %v499 = vld [vmem:[#allocation6 + $0xf8] sm:$0xff]
    %v500 = vld [vmem:[#allocation6 + $0x100] sm:$0xff]
    %v501 = vld [vmem:[#allocation6 + $0x108] sm:$0xff]
    %v502 = vld [vmem:[#allocation6 + $0x110] sm:$0xff]
    %v503 = vld [vmem:[#allocation6 + $0x118] sm:$0xff]
    %v504 = vld [vmem:[#allocation6 + $0x120] sm:$0xff]
    %v505 = vld [vmem:[#allocation6 + $0x128] sm:$0xff]
    %v506 = vld [vmem:[#allocation6 + $0x130] sm:$0xff]
    %v507 = vld [vmem:[#allocation6 + $0x138] sm:$0xff]
    %v508 = vld [vmem:[#allocation6 + $0x140] sm:$0xff]
    %v509 = vld [vmem:[#allocation6 + $0x148] sm:$0xff]
    %v510 = vld [vmem:[#allocation6 + $0x150] sm:$0xff]
    %v511 = vld [vmem:[#allocation6 + $0x158] sm:$0xff]
    %v512 = vld [vmem:[#allocation6 + $0x160] sm:$0xff]
    %v513 = vld [vmem:[#allocation6 + $0x168] sm:$0xff]
    %v514 = vld [vmem:[#allocation6 + $0x170] sm:$0xff]
    %v515 = vld [vmem:[#allocation6 + $0x178] sm:$0xff]
    %v516 = vld [vmem:[#allocation6 + $0x180] sm:$0xff]
    %v517 = vld [vmem:[#allocation6 + $0x188] sm:$0xff]
    %v518 = vld [vmem:[#allocation6 + $0x190] sm:$0xff]
    %v519 = vld [vmem:[#allocation6 + $0x198] sm:$0xff]
    %v520 = vld [vmem:[#allocation6 + $0x1a0] sm:$0xff]
    %v521 = vld [vmem:[#allocation6 + $0x1a8] sm:$0xff]
    %v522 = vld [vmem:[#allocation6 + $0x1b0] sm:$0xff]
    %v523 = vld [vmem:[#allocation6 + $0x1b8] sm:$0xff]
    %v524 = vld [vmem:[#allocation6 + $0x1c0] sm:$0xff]
    %v525 = vld [vmem:[#allocation6 + $0x1c8] sm:$0xff]
    %v526 = vld [vmem:[#allocation6 + $0x1d0] sm:$0xff]
    %v527 = vld [vmem:[#allocation6 + $0x1d8] sm:$0xff]
    %v528 = vld [vmem:[#allocation6 + $0x1e0] sm:$0xff]
    %v529 = vld [vmem:[#allocation6 + $0x1e8] sm:$0xff]
    %v530 = vld [vmem:[#allocation6 + $0x1f0] sm:$0xff]
    %v531 = vld [vmem:[#allocation6 + $0x1f8] sm:$0xff]
    %v532 = vld [vmem:[#allocation8] sm:$0xff]
    %v533 = vld [vmem:[#allocation8 + $0x8] sm:$0xff]
    %v534 = vld [vmem:[#allocation8 + $0x10] sm:$0xff]
    %v535 = vld [vmem:[#allocation8 + $0x18] sm:$0xff]
    %v536 = vld [vmem:[#allocation8 + $0x20] sm:$0xff]
    %v537 = vld [vmem:[#allocation8 + $0x28] sm:$0xff]
    %v538 = vld [vmem:[#allocation8 + $0x30] sm:$0xff]
    %v539 = vld [vmem:[#allocation8 + $0x38] sm:$0xff]
    %v540 = vld [vmem:[#allocation8 + $0x40] sm:$0xff]
    %v541 = vld [vmem:[#allocation8 + $0x48] sm:$0xff]
    %v542 = vld [vmem:[#allocation8 + $0x50] sm:$0xff]
    %v543 = vld [vmem:[#allocation8 + $0x58] sm:$0xff]
    %v544 = vld [vmem:[#allocation8 + $0x60] sm:$0xff]
    %v545 = vld [vmem:[#allocation8 + $0x68] sm:$0xff]
    %v546 = vld [vmem:[#allocation8 + $0x70] sm:$0xff]
    %v547 = vld [vmem:[#allocation8 + $0x78] sm:$0xff]
    %v548 = vld [vmem:[#allocation8 + $0x80] sm:$0xff]
    %v549 = vld [vmem:[#allocation8 + $0x88] sm:$0xff]
    %v550 = vld [vmem:[#allocation8 + $0x90] sm:$0xff]
    %v551 = vld [vmem:[#allocation8 + $0x98] sm:$0xff]
    %v552 = vld [vmem:[#allocation8 + $0xa0] sm:$0xff]
    %v553 = vld [vmem:[#allocation8 + $0xa8] sm:$0xff]
    %v554 = vld [vmem:[#allocation8 + $0xb0] sm:$0xff]
    %v555 = vld [vmem:[#allocation8 + $0xb8] sm:$0xff]
    %v556 = vld [vmem:[#allocation8 + $0xc0] sm:$0xff]
    %v557 = vld [vmem:[#allocation8 + $0xc8] sm:$0xff]
    %v558 = vld [vmem:[#allocation8 + $0xd0] sm:$0xff]
    %v559 = vld [vmem:[#allocation8 + $0xd8] sm:$0xff]
    %v560 = vld [vmem:[#allocation8 + $0xe0] sm:$0xff]
    %v561 = vld [vmem:[#allocation8 + $0xe8] sm:$0xff]
    %v562 = vld [vmem:[#allocation8 + $0xf0] sm:$0xff]
    %v563 = vld [vmem:[#allocation8 + $0xf8] sm:$0xff]
    %v564 = vld [vmem:[#allocation8 + $0x100] sm:$0xff]
    %v565 = vld [vmem:[#allocation8 + $0x108] sm:$0xff]
    %v566 = vld [vmem:[#allocation8 + $0x110] sm:$0xff]
    %v567 = vld [vmem:[#allocation8 + $0x118] sm:$0xff]
    %v568 = vld [vmem:[#allocation8 + $0x120] sm:$0xff]
    %v569 = vld [vmem:[#allocation8 + $0x128] sm:$0xff]
    %v570 = vld [vmem:[#allocation8 + $0x130] sm:$0xff]
    %v571 = vld [vmem:[#allocation8 + $0x138] sm:$0xff]
    %v572 = vld [vmem:[#allocation8 + $0x140] sm:$0xff]
    %v573 = vld [vmem:[#allocation8 + $0x148] sm:$0xff]
    %v574 = vld [vmem:[#allocation8 + $0x150] sm:$0xff]
    %v575 = vld [vmem:[#allocation8 + $0x158] sm:$0xff]
    %v576 = vld [vmem:[#allocation8 + $0x160] sm:$0xff]
    %v577 = vld [vmem:[#allocation8 + $0x168] sm:$0xff]
    %v578 = vld [vmem:[#allocation8 + $0x170] sm:$0xff]
    %v579 = vld [vmem:[#allocation8 + $0x178] sm:$0xff]
    %v580 = vld [vmem:[#allocation8 + $0x180] sm:$0xff]
    %v581 = vld [vmem:[#allocation8 + $0x188] sm:$0xff]
    %v582 = vld [vmem:[#allocation8 + $0x190] sm:$0xff]
    %v583 = vld [vmem:[#allocation8 + $0x198] sm:$0xff]
    %v584 = vld [vmem:[#allocation8 + $0x1a0] sm:$0xff]
    %v585 = vld [vmem:[#allocation8 + $0x1a8] sm:$0xff]
    %v586 = vld [vmem:[#allocation8 + $0x1b0] sm:$0xff]
    %v587 = vld [vmem:[#allocation8 + $0x1b8] sm:$0xff]
    %v588 = vld [vmem:[#allocation8 + $0x1c0] sm:$0xff]
    %v589 = vld [vmem:[#allocation8 + $0x1c8] sm:$0xff]
    %v590 = vld [vmem:[#allocation8 + $0x1d0] sm:$0xff]
    %v591 = vld [vmem:[#allocation8 + $0x1d8] sm:$0xff]
    %v592 = vld [vmem:[#allocation8 + $0x1e0] sm:$0xff]
    %v593 = vld [vmem:[#allocation8 + $0x1e8] sm:$0xff]
    %v594 = vld [vmem:[#allocation8 + $0x1f0] sm:$0xff]
    %v595 = vld [vmem:[#allocation8 + $0x1f8] sm:$0xff]
    %v660 = vunpack.c.l.b16 %v532
    %v661 = vunpack.c.h.b16 %v532
    %v662 = vunpack.c.l.b16 %v533
    %v663 = vunpack.c.h.b16 %v533
    %v664 = vunpack.c.l.b16 %v534
    %v665 = vunpack.c.h.b16 %v534
    %v666 = vunpack.c.l.b16 %v535
    %v667 = vunpack.c.h.b16 %v535
    %v668 = vunpack.c.l.b16 %v536
    %v669 = vunpack.c.h.b16 %v536
    %v670 = vunpack.c.l.b16 %v537
    %v671 = vunpack.c.h.b16 %v537
    %v672 = vunpack.c.l.b16 %v538
    %v673 = vunpack.c.h.b16 %v538
    %v674 = vunpack.c.l.b16 %v539
    %v675 = vunpack.c.h.b16 %v539
    %v676 = vunpack.c.l.b16 %v540
    %v677 = vunpack.c.h.b16 %v540
    %v678 = vunpack.c.l.b16 %v541
    %v679 = vunpack.c.h.b16 %v541
    %v680 = vunpack.c.l.b16 %v542
    %v681 = vunpack.c.h.b16 %v542
    %v682 = vunpack.c.l.b16 %v543
    %v683 = vunpack.c.h.b16 %v543
    %v684 = vunpack.c.l.b16 %v544
    %v685 = vunpack.c.h.b16 %v544
    %v686 = vunpack.c.l.b16 %v545
    %v687 = vunpack.c.h.b16 %v545
    %v688 = vunpack.c.l.b16 %v546
    %v689 = vunpack.c.h.b16 %v546
    %v690 = vunpack.c.l.b16 %v547
    %v691 = vunpack.c.h.b16 %v547
    %v692 = vunpack.c.l.b16 %v548
    %v693 = vunpack.c.h.b16 %v548
    %v694 = vunpack.c.l.b16 %v549
    %v695 = vunpack.c.h.b16 %v549
    %v696 = vunpack.c.l.b16 %v550
    %v697 = vunpack.c.h.b16 %v550
    %v698 = vunpack.c.l.b16 %v551
    %v699 = vunpack.c.h.b16 %v551
    %v700 = vunpack.c.l.b16 %v552
    %v701 = vunpack.c.h.b16 %v552
    %v702 = vunpack.c.l.b16 %v553
    %v703 = vunpack.c.h.b16 %v553
    %v704 = vunpack.c.l.b16 %v554
    %v705 = vunpack.c.h.b16 %v554
    %v706 = vunpack.c.l.b16 %v555
    %v707 = vunpack.c.h.b16 %v555
    %v708 = vunpack.c.l.b16 %v556
    %v709 = vunpack.c.h.b16 %v556
    %v710 = vunpack.c.l.b16 %v557
    %v711 = vunpack.c.h.b16 %v557
    %v712 = vunpack.c.l.b16 %v558
    %v713 = vunpack.c.h.b16 %v558
    %v714 = vunpack.c.l.b16 %v559
    %v715 = vunpack.c.h.b16 %v559
    %v716 = vunpack.c.l.b16 %v560
    %v717 = vunpack.c.h.b16 %v560
    %v718 = vunpack.c.l.b16 %v561
    %v719 = vunpack.c.h.b16 %v561
    %v720 = vunpack.c.l.b16 %v562
    %v721 = vunpack.c.h.b16 %v562
    %v722 = vunpack.c.l.b16 %v563
    %v723 = vunpack.c.h.b16 %v563
    %v724 = vunpack.c.l.b16 %v564
    %v725 = vunpack.c.h.b16 %v564
    %v726 = vunpack.c.l.b16 %v565
    %v727 = vunpack.c.h.b16 %v565
    %v728 = vunpack.c.l.b16 %v566
    %v729 = vunpack.c.h.b16 %v566
    %v730 = vunpack.c.l.b16 %v567
    %v731 = vunpack.c.h.b16 %v567
    %v732 = vunpack.c.l.b16 %v568
    %v733 = vunpack.c.h.b16 %v568
    %v734 = vunpack.c.l.b16 %v569
    %v735 = vunpack.c.h.b16 %v569
    %v736 = vunpack.c.l.b16 %v570
    %v737 = vunpack.c.h.b16 %v570
    %v738 = vunpack.c.l.b16 %v571
    %v739 = vunpack.c.h.b16 %v571
    %v740 = vunpack.c.l.b16 %v572
    %v741 = vunpack.c.h.b16 %v572
    %v742 = vunpack.c.l.b16 %v573
    %v743 = vunpack.c.h.b16 %v573
    %v744 = vunpack.c.l.b16 %v574
    %v745 = vunpack.c.h.b16 %v574
    %v746 = vunpack.c.l.b16 %v575
    %v747 = vunpack.c.h.b16 %v575
    %v748 = vunpack.c.l.b16 %v576
    %v749 = vunpack.c.h.b16 %v576
    %v750 = vunpack.c.l.b16 %v577
    %v751 = vunpack.c.h.b16 %v577
    %v752 = vunpack.c.l.b16 %v578
    %v753 = vunpack.c.h.b16 %v578
    %v754 = vunpack.c.l.b16 %v579
    %v755 = vunpack.c.h.b16 %v579
    %v756 = vunpack.c.l.b16 %v580
    %v757 = vunpack.c.h.b16 %v580
    %v758 = vunpack.c.l.b16 %v581
    %v759 = vunpack.c.h.b16 %v581
    %v760 = vunpack.c.l.b16 %v582
    %v761 = vunpack.c.h.b16 %v582
    %v762 = vunpack.c.l.b16 %v583
    %v763 = vunpack.c.h.b16 %v583
    %v764 = vunpack.c.l.b16 %v584
    %v765 = vunpack.c.h.b16 %v584
    %v766 = vunpack.c.l.b16 %v585
    %v767 = vunpack.c.h.b16 %v585
    %v768 = vunpack.c.l.b16 %v586
    %v769 = vunpack.c.h.b16 %v586
    %v770 = vunpack.c.l.b16 %v587
    %v771 = vunpack.c.h.b16 %v587
    %v772 = vunpack.c.l.b16 %v588
    %v773 = vunpack.c.h.b16 %v588
    %v774 = vunpack.c.l.b16 %v589
    %v775 = vunpack.c.h.b16 %v589
    %v776 = vunpack.c.l.b16 %v590
    %v777 = vunpack.c.h.b16 %v590
    %v778 = vunpack.c.l.b16 %v591
    %v779 = vunpack.c.h.b16 %v591
    %v780 = vunpack.c.l.b16 %v592
    %v781 = vunpack.c.h.b16 %v592
    %v782 = vunpack.c.l.b16 %v593
    %v783 = vunpack.c.h.b16 %v593
    %v784 = vunpack.c.l.b16 %v594
    %v785 = vunpack.c.h.b16 %v594
    %v786 = vunpack.c.l.b16 %v595
    %v787 = vunpack.c.h.b16 %v595
    %v788 = vpack.c.b16 %v664, %v660
    %v789 = vpack.c.b16 %v665, %v661
    %v790 = vpack.c.b16 %v666, %v662
    %v791 = vpack.c.b16 %v667, %v663
    %v792 = vpack.c.b16 %v672, %v668
    %v793 = vpack.c.b16 %v673, %v669
    %v794 = vpack.c.b16 %v674, %v670
    %v795 = vpack.c.b16 %v675, %v671
    %v796 = vpack.c.b16 %v680, %v676
    %v797 = vpack.c.b16 %v681, %v677
    %v798 = vpack.c.b16 %v682, %v678
    %v799 = vpack.c.b16 %v683, %v679
    %v800 = vpack.c.b16 %v688, %v684
    %v801 = vpack.c.b16 %v689, %v685
    %v802 = vpack.c.b16 %v690, %v686
    %v803 = vpack.c.b16 %v691, %v687
    %v804 = vpack.c.b16 %v696, %v692
    %v805 = vpack.c.b16 %v697, %v693
    %v806 = vpack.c.b16 %v698, %v694
    %v807 = vpack.c.b16 %v699, %v695
    %v808 = vpack.c.b16 %v704, %v700
    %v809 = vpack.c.b16 %v705, %v701
    %v810 = vpack.c.b16 %v706, %v702
    %v811 = vpack.c.b16 %v707, %v703
    %v812 = vpack.c.b16 %v712, %v708
    %v813 = vpack.c.b16 %v713, %v709
    %v814 = vpack.c.b16 %v714, %v710
    %v815 = vpack.c.b16 %v715, %v711
    %v816 = vpack.c.b16 %v720, %v716
    %v817 = vpack.c.b16 %v721, %v717
    %v818 = vpack.c.b16 %v722, %v718
    %v819 = vpack.c.b16 %v723, %v719
    %v820 = vpack.c.b16 %v728, %v724
    %v821 = vpack.c.b16 %v729, %v725
    %v822 = vpack.c.b16 %v730, %v726
    %v823 = vpack.c.b16 %v731, %v727
    %v824 = vpack.c.b16 %v736, %v732
    %v825 = vpack.c.b16 %v737, %v733
    %v826 = vpack.c.b16 %v738, %v734
    %v827 = vpack.c.b16 %v739, %v735
    %v828 = vpack.c.b16 %v744, %v740
    %v829 = vpack.c.b16 %v745, %v741
    %v830 = vpack.c.b16 %v746, %v742
    %v831 = vpack.c.b16 %v747, %v743
    %v832 = vpack.c.b16 %v752, %v748
    %v833 = vpack.c.b16 %v753, %v749
    %v834 = vpack.c.b16 %v754, %v750
    %v835 = vpack.c.b16 %v755, %v751
    %v836 = vpack.c.b16 %v760, %v756
    %v837 = vpack.c.b16 %v761, %v757
    %v838 = vpack.c.b16 %v762, %v758
    %v839 = vpack.c.b16 %v763, %v759
    %v840 = vpack.c.b16 %v768, %v764
    %v841 = vpack.c.b16 %v769, %v765
    %v842 = vpack.c.b16 %v770, %v766
    %v843 = vpack.c.b16 %v771, %v767
    %v844 = vpack.c.b16 %v776, %v772
    %v845 = vpack.c.b16 %v777, %v773
    %v846 = vpack.c.b16 %v778, %v774
    %v847 = vpack.c.b16 %v779, %v775
    %v848 = vpack.c.b16 %v784, %v780
    %v849 = vpack.c.b16 %v785, %v781
    %v850 = vpack.c.b16 %v786, %v782
    %v851 = vpack.c.b16 %v787, %v783
    %916 = vmatprep.subr.bf16.mxu0 %v789
    %917 = vmatpush1.bf16.msra.mxu0 %v788
    %918 = vmatprep.subr.bf16.mxu0 %v793
    %919 = vmatpush1.bf16.msra.mxu0 %v792
    %920 = vmatprep.subr.bf16.mxu0 %v797
    %921 = vmatpush1.bf16.msra.mxu0 %v796
    %922 = vmatprep.subr.bf16.mxu0 %v801
    %923 = vmatpush1.bf16.msra.mxu0 %v800
    %924 = vmatprep.subr.bf16.mxu0 %v805
    %925 = vmatpush1.bf16.msra.mxu0 %v804
    %926 = vmatprep.subr.bf16.mxu0 %v809
    %927 = vmatpush1.bf16.msra.mxu0 %v808
    %928 = vmatprep.subr.bf16.mxu0 %v813
    %929 = vmatpush1.bf16.msra.mxu0 %v812
    %930 = vmatprep.subr.bf16.mxu0 %v817
    %931 = vmatpush1.bf16.msra.mxu0 %v816
    %932 = vmatprep.subr.bf16.mxu0 %v821
    %933 = vmatpush1.bf16.msra.mxu0 %v820
    %934 = vmatprep.subr.bf16.mxu0 %v825
    %935 = vmatpush1.bf16.msra.mxu0 %v824
    %936 = vmatprep.subr.bf16.mxu0 %v829
    %937 = vmatpush1.bf16.msra.mxu0 %v828
    %938 = vmatprep.subr.bf16.mxu0 %v833
    %939 = vmatpush1.bf16.msra.mxu0 %v832
    %940 = vmatprep.subr.bf16.mxu0 %v837
    %941 = vmatpush1.bf16.msra.mxu0 %v836
    %942 = vmatprep.subr.bf16.mxu0 %v841
    %943 = vmatpush1.bf16.msra.mxu0 %v840
    %944 = vmatprep.subr.bf16.mxu0 %v845
    %945 = vmatpush1.bf16.msra.mxu0 %v844
    %946 = vmatprep.subr.bf16.mxu0 %v849
    %947 = vmatpush1.bf16.msra.mxu0 %v848
    %948 = vmatprep.mubr.bf16.mxu0 %v459
    %949 = vmatmul.mubr.bf16.gmra.mrb[0].mxu0 %v458
    %v950 = vpop.f32.mrb[0].mxu0
    %v951 = vadd.f32 0.0, %v950
    %v952 = vpop.f32.mrb[0].mxu0
    %v953 = vadd.f32 0.0, %v952
    %v954 = vpop.f32.mrb[0].mxu0
    %v955 = vadd.f32 0.0, %v954
    %v956 = vpop.f32.mrb[0].mxu0
    %v957 = vadd.f32 0.0, %v956
    %958 = vmatprep.mubr.bf16.mxu0 %v461
    %959 = vmatmul.mubr.bf16.gmra.mrb[0].mxu0 %v460
    %v960 = vpop.f32.mrb[0].mxu0
    %v961 = vadd.f32 0.0, %v960
    %v962 = vpop.f32.mrb[0].mxu0
    %v963 = vadd.f32 0.0, %v962
    %v964 = vpop.f32.mrb[0].mxu0
    %v965 = vadd.f32 0.0, %v964
    %v966 = vpop.f32.mrb[0].mxu0
    %v967 = vadd.f32 0.0, %v966
    %968 = vmatprep.mubr.bf16.mxu0 %v463
    %969 = vmatmul.mubr.bf16.gmra.mrb[0].mxu0 %v462
    %v970 = vpop.f32.mrb[0].mxu0
    %v971 = vadd.f32 0.0, %v970
    %v972 = vpop.f32.mrb[0].mxu0
    %v973 = vadd.f32 0.0, %v972
    %v974 = vpop.f32.mrb[0].mxu0
    %v975 = vadd.f32 0.0, %v974
    %v976 = vpop.f32.mrb[0].mxu0
    %v977 = vadd.f32 0.0, %v976
    %978 = vmatprep.mubr.bf16.mxu0 %v465
    %979 = vmatmul.mubr.bf16.gmra.mrb[0].mxu0 %v464
    %v980 = vpop.f32.mrb[0].mxu0
    %v981 = vadd.f32 0.0, %v980
    %v982 = vpop.f32.mrb[0].mxu0
    %v983 = vadd.f32 0.0, %v982
    %v984 = vpop.f32.mrb[0].mxu0
    %v985 = vadd.f32 0.0, %v984
    %v986 = vpop.f32.mrb[0].mxu0
    %v987 = vadd.f32 0.0, %v986
    %988 = vmatprep.mubr.bf16.mxu0 %v467
    %989 = vmatmul.mubr.bf16.gmra.mrb[0].mxu0 %v466
    %v990 = vpop.f32.mrb[0].mxu0
    %v991 = vadd.f32 0.0, %v990
    %v992 = vpop.f32.mrb[0].mxu0
    %v993 = vadd.f32 0.0, %v992
    %v994 = vpop.f32.mrb[0].mxu0
    %v995 = vadd.f32 0.0, %v994
    %v996 = vpop.f32.mrb[0].mxu0
    %v997 = vadd.f32 0.0, %v996
    %998 = vdwg.mxu0
    %999 = vmatprep.subr.bf16.mxu0 %v791
    %1000 = vmatpush1.bf16.msra.mxu0 %v790
    %1001 = vmatprep.subr.bf16.mxu0 %v795
    %1002 = vmatpush1.bf16.msra.mxu0 %v794
    %1003 = vmatprep.subr.bf16.mxu0 %v799
    %1004 = vmatpush1.bf16.msra.mxu0 %v798
    %1005 = vmatprep.subr.bf16.mxu0 %v803
    %1006 = vmatpush1.bf16.msra.mxu0 %v802
    %1007 = vmatprep.subr.bf16.mxu0 %v807
    %1008 = vmatpush1.bf16.msra.mxu0 %v806
    %1009 = vmatprep.subr.bf16.mxu0 %v811
    %1010 = vmatpush1.bf16.msra.mxu0 %v810
    %1011 = vmatprep.subr.bf16.mxu0 %v815
    %1012 = vmatpush1.bf16.msra.mxu0 %v814
    %1013 = vmatprep.subr.bf16.mxu0 %v819
    %1014 = vmatpush1.bf16.msra.mxu0 %v818
    %1015 = vmatprep.subr.bf16.mxu0 %v823
    %1016 = vmatpush1.bf16.msra.mxu0 %v822
    %1017 = vmatprep.subr.bf16.mxu0 %v827
    %1018 = vmatpush1.bf16.msra.mxu0 %v826
    %1019 = vmatprep.subr.bf16.mxu0 %v831
    %1020 = vmatpush1.bf16.msra.mxu0 %v830
    %1021 = vmatprep.subr.bf16.mxu0 %v835
    %1022 = vmatpush1.bf16.msra.mxu0 %v834
    %1023 = vmatprep.subr.bf16.mxu0 %v839
    %1024 = vmatpush1.bf16.msra.mxu0 %v838
    %1025 = vmatprep.subr.bf16.mxu0 %v843
    %1026 = vmatpush1.bf16.msra.mxu0 %v842
    %1027 = vmatprep.subr.bf16.mxu0 %v847
    %1028 = vmatpush1.bf16.msra.mxu0 %v846
    %1029 = vmatprep.subr.bf16.mxu0 %v851
    %1030 = vmatpush1.bf16.msra.mxu0 %v850
    %1031 = vmatprep.mubr.bf16.mxu0 %v459
    %1032 = vmatmul.mubr.bf16.gmra.mrb[0].mxu0 %v458
    %v1033 = vpop.f32.mrb[0].mxu0
    %v1034 = vadd.f32 0.0, %v1033
    %v1035 = vpop.f32.mrb[0].mxu0
    %v1036 = vadd.f32 0.0, %v1035
    %v1037 = vpop.f32.mrb[0].mxu0
    %v1038 = vadd.f32 0.0, %v1037
    %v1039 = vpop.f32.mrb[0].mxu0
    %v1040 = vadd.f32 0.0, %v1039
    %1041 = vmatprep.mubr.bf16.mxu0 %v461
    %1042 = vmatmul.mubr.bf16.gmra.mrb[0].mxu0 %v460
    %v1043 = vpop.f32.mrb[0].mxu0
    %v1044 = vadd.f32 0.0, %v1043
    %v1045 = vpop.f32.mrb[0].mxu0
    %v1046 = vadd.f32 0.0, %v1045
    %v1047 = vpop.f32.mrb[0].mxu0
    %v1048 = vadd.f32 0.0, %v1047
    %v1049 = vpop.f32.mrb[0].mxu0
    %v1050 = vadd.f32 0.0, %v1049
    %1051 = vmatprep.mubr.bf16.mxu0 %v463
    %1052 = vmatmul.mubr.bf16.gmra.mrb[0].mxu0 %v462
    %v1053 = vpop.f32.mrb[0].mxu0
    %v1054 = vadd.f32 0.0, %v1053
    %v1055 = vpop.f32.mrb[0].mxu0
    %v1056 = vadd.f32 0.0, %v1055
    %v1057 = vpop.f32.mrb[0].mxu0
    %v1058 = vadd.f32 0.0, %v1057
    %v1059 = vpop.f32.mrb[0].mxu0
    %v1060 = vadd.f32 0.0, %v1059
    %1061 = vmatprep.mubr.bf16.mxu0 %v465
    %1062 = vmatmul.mubr.bf16.gmra.mrb[0].mxu0 %v464
    %v1063 = vpop.f32.mrb[0].mxu0
    %v1064 = vadd.f32 0.0, %v1063
    %v1065 = vpop.f32.mrb[0].mxu0
    %v1066 = vadd.f32 0.0, %v1065
    %v1067 = vpop.f32.mrb[0].mxu0
    %v1068 = vadd.f32 0.0, %v1067
    %v1069 = vpop.f32.mrb[0].mxu0
    %v1070 = vadd.f32 0.0, %v1069
    %1071 = vmatprep.mubr.bf16.mxu0 %v467
    %1072 = vmatmul.mubr.bf16.gmra.mrb[0].mxu0 %v466
    %v1073 = vpop.f32.mrb[0].mxu0
    %v1074 = vadd.f32 0.0, %v1073
    %v1075 = vpop.f32.mrb[0].mxu0
    %v1076 = vadd.f32 0.0, %v1075
    %v1077 = vpop.f32.mrb[0].mxu0
    %v1078 = vadd.f32 0.0, %v1077
    %v1079 = vpop.f32.mrb[0].mxu0
    %v1080 = vadd.f32 0.0, %v1079
    %1081 = vdwg.mxu0
    %v1146 = vunpack.c.l.b16 %v468
    %v1147 = vunpack.c.h.b16 %v468
    %v1148 = vunpack.c.l.b16 %v469
    %v1149 = vunpack.c.h.b16 %v469
    %v1150 = vunpack.c.l.b16 %v470
    %v1151 = vunpack.c.h.b16 %v470
    %v1152 = vunpack.c.l.b16 %v471
    %v1153 = vunpack.c.h.b16 %v471
    %v1154 = vunpack.c.l.b16 %v472
    %v1155 = vunpack.c.h.b16 %v472
    %v1156 = vunpack.c.l.b16 %v473
    %v1157 = vunpack.c.h.b16 %v473
    %v1158 = vunpack.c.l.b16 %v474
    %v1159 = vunpack.c.h.b16 %v474
    %v1160 = vunpack.c.l.b16 %v475
    %v1161 = vunpack.c.h.b16 %v475
    %v1162 = vunpack.c.l.b16 %v476
    %v1163 = vunpack.c.h.b16 %v476
    %v1164 = vunpack.c.l.b16 %v477
    %v1165 = vunpack.c.h.b16 %v477
    %v1166 = vunpack.c.l.b16 %v478
    %v1167 = vunpack.c.h.b16 %v478
    %v1168 = vunpack.c.l.b16 %v479
    %v1169 = vunpack.c.h.b16 %v479
    %v1170 = vunpack.c.l.b16 %v480
    %v1171 = vunpack.c.h.b16 %v480
    %v1172 = vunpack.c.l.b16 %v481
    %v1173 = vunpack.c.h.b16 %v481
    %v1174 = vunpack.c.l.b16 %v482
    %v1175 = vunpack.c.h.b16 %v482
    %v1176 = vunpack.c.l.b16 %v483
    %v1177 = vunpack.c.h.b16 %v483
    %v1178 = vunpack.c.l.b16 %v484
    %v1179 = vunpack.c.h.b16 %v484
    %v1180 = vunpack.c.l.b16 %v485
    %v1181 = vunpack.c.h.b16 %v485
    %v1182 = vunpack.c.l.b16 %v486
    %v1183 = vunpack.c.h.b16 %v486
    %v1184 = vunpack.c.l.b16 %v487
    %v1185 = vunpack.c.h.b16 %v487
    %v1186 = vunpack.c.l.b16 %v488
    %v1187 = vunpack.c.h.b16 %v488
    %v1188 = vunpack.c.l.b16 %v489
    %v1189 = vunpack.c.h.b16 %v489
    %v1190 = vunpack.c.l.b16 %v490
    %v1191 = vunpack.c.h.b16 %v490
    %v1192 = vunpack.c.l.b16 %v491
    %v1193 = vunpack.c.h.b16 %v491
    %v1194 = vunpack.c.l.b16 %v492
    %v1195 = vunpack.c.h.b16 %v492
    %v1196 = vunpack.c.l.b16 %v493
    %v1197 = vunpack.c.h.b16 %v493
    %v1198 = vunpack.c.l.b16 %v494
    %v1199 = vunpack.c.h.b16 %v494
    %v1200 = vunpack.c.l.b16 %v495
    %v1201 = vunpack.c.h.b16 %v495
    %v1202 = vunpack.c.l.b16 %v496
    %v1203 = vunpack.c.h.b16 %v496
    %v1204 = vunpack.c.l.b16 %v497
    %v1205 = vunpack.c.h.b16 %v497
    %v1206 = vunpack.c.l.b16 %v498
    %v1207 = vunpack.c.h.b16 %v498
    %v1208 = vunpack.c.l.b16 %v499
    %v1209 = vunpack.c.h.b16 %v499
    %v1210 = vunpack.c.l.b16 %v500
    %v1211 = vunpack.c.h.b16 %v500
    %v1212 = vunpack.c.l.b16 %v501
    %v1213 = vunpack.c.h.b16 %v501
    %v1214 = vunpack.c.l.b16 %v502
    %v1215 = vunpack.c.h.b16 %v502
    %v1216 = vunpack.c.l.b16 %v503
    %v1217 = vunpack.c.h.b16 %v503
    %v1218 = vunpack.c.l.b16 %v504
    %v1219 = vunpack.c.h.b16 %v504
    %v1220 = vunpack.c.l.b16 %v505
    %v1221 = vunpack.c.h.b16 %v505
    %v1222 = vunpack.c.l.b16 %v506
    %v1223 = vunpack.c.h.b16 %v506
    %v1224 = vunpack.c.l.b16 %v507
    %v1225 = vunpack.c.h.b16 %v507
    %v1226 = vunpack.c.l.b16 %v508
    %v1227 = vunpack.c.h.b16 %v508
    %v1228 = vunpack.c.l.b16 %v509
    %v1229 = vunpack.c.h.b16 %v509
    %v1230 = vunpack.c.l.b16 %v510
    %v1231 = vunpack.c.h.b16 %v510
    %v1232 = vunpack.c.l.b16 %v511
    %v1233 = vunpack.c.h.b16 %v511
    %v1234 = vunpack.c.l.b16 %v512
    %v1235 = vunpack.c.h.b16 %v512
    %v1236 = vunpack.c.l.b16 %v513
    %v1237 = vunpack.c.h.b16 %v513
    %v1238 = vunpack.c.l.b16 %v514
    %v1239 = vunpack.c.h.b16 %v514
    %v1240 = vunpack.c.l.b16 %v515
    %v1241 = vunpack.c.h.b16 %v515
    %v1242 = vunpack.c.l.b16 %v516
    %v1243 = vunpack.c.h.b16 %v516
    %v1244 = vunpack.c.l.b16 %v517
    %v1245 = vunpack.c.h.b16 %v517
    %v1246 = vunpack.c.l.b16 %v518
    %v1247 = vunpack.c.h.b16 %v518
    %v1248 = vunpack.c.l.b16 %v519
    %v1249 = vunpack.c.h.b16 %v519
    %v1250 = vunpack.c.l.b16 %v520
    %v1251 = vunpack.c.h.b16 %v520
    %v1252 = vunpack.c.l.b16 %v521
    %v1253 = vunpack.c.h.b16 %v521
    %v1254 = vunpack.c.l.b16 %v522
    %v1255 = vunpack.c.h.b16 %v522
    %v1256 = vunpack.c.l.b16 %v523
    %v1257 = vunpack.c.h.b16 %v523
    %v1258 = vunpack.c.l.b16 %v524
    %v1259 = vunpack.c.h.b16 %v524
    %v1260 = vunpack.c.l.b16 %v525
    %v1261 = vunpack.c.h.b16 %v525
    %v1262 = vunpack.c.l.b16 %v526
    %v1263 = vunpack.c.h.b16 %v526
    %v1264 = vunpack.c.l.b16 %v527
    %v1265 = vunpack.c.h.b16 %v527
    %v1266 = vunpack.c.l.b16 %v528
    %v1267 = vunpack.c.h.b16 %v528
    %v1268 = vunpack.c.l.b16 %v529
    %v1269 = vunpack.c.h.b16 %v529
    %v1270 = vunpack.c.l.b16 %v530
    %v1271 = vunpack.c.h.b16 %v530
    %v1272 = vunpack.c.l.b16 %v531
    %v1273 = vunpack.c.h.b16 %v531
    %v1274 = vpack.c.b16 %v1150, %v1146
    %v1275 = vpack.c.b16 %v1151, %v1147
    %v1276 = vpack.c.b16 %v1152, %v1148
    %v1277 = vpack.c.b16 %v1153, %v1149
    %v1278 = vpack.c.b16 %v1158, %v1154
    %v1279 = vpack.c.b16 %v1159, %v1155
    %v1280 = vpack.c.b16 %v1160, %v1156
    %v1281 = vpack.c.b16 %v1161, %v1157
    %v1282 = vpack.c.b16 %v1166, %v1162
    %v1283 = vpack.c.b16 %v1167, %v1163
    %v1284 = vpack.c.b16 %v1168, %v1164
    %v1285 = vpack.c.b16 %v1169, %v1165
    %v1286 = vpack.c.b16 %v1174, %v1170
    %v1287 = vpack.c.b16 %v1175, %v1171
    %v1288 = vpack.c.b16 %v1176, %v1172
    %v1289 = vpack.c.b16 %v1177, %v1173
    %v1290 = vpack.c.b16 %v1182, %v1178
    %v1291 = vpack.c.b16 %v1183, %v1179
    %v1292 = vpack.c.b16 %v1184, %v1180
    %v1293 = vpack.c.b16 %v1185, %v1181
    %v1294 = vpack.c.b16 %v1190, %v1186
    %v1295 = vpack.c.b16 %v1191, %v1187
    %v1296 = vpack.c.b16 %v1192, %v1188
    %v1297 = vpack.c.b16 %v1193, %v1189
    %v1298 = vpack.c.b16 %v1198, %v1194
    %v1299 = vpack.c.b16 %v1199, %v1195
    %v1300 = vpack.c.b16 %v1200, %v1196
    %v1301 = vpack.c.b16 %v1201, %v1197
    %v1302 = vpack.c.b16 %v1206, %v1202
    %v1303 = vpack.c.b16 %v1207, %v1203
    %v1304 = vpack.c.b16 %v1208, %v1204
    %v1305 = vpack.c.b16 %v1209, %v1205
    %v1306 = vpack.c.b16 %v1214, %v1210
    %v1307 = vpack.c.b16 %v1215, %v1211
    %v1308 = vpack.c.b16 %v1216, %v1212
    %v1309 = vpack.c.b16 %v1217, %v1213
    %v1310 = vpack.c.b16 %v1222, %v1218
    %v1311 = vpack.c.b16 %v1223, %v1219
    %v1312 = vpack.c.b16 %v1224, %v1220
    %v1313 = vpack.c.b16 %v1225, %v1221
    %v1314 = vpack.c.b16 %v1230, %v1226
    %v1315 = vpack.c.b16 %v1231, %v1227
    %v1316 = vpack.c.b16 %v1232, %v1228
    %v1317 = vpack.c.b16 %v1233, %v1229
    %v1318 = vpack.c.b16 %v1238, %v1234
    %v1319 = vpack.c.b16 %v1239, %v1235
    %v1320 = vpack.c.b16 %v1240, %v1236
    %v1321 = vpack.c.b16 %v1241, %v1237
    %v1322 = vpack.c.b16 %v1246, %v1242
    %v1323 = vpack.c.b16 %v1247, %v1243
    %v1324 = vpack.c.b16 %v1248, %v1244
    %v1325 = vpack.c.b16 %v1249, %v1245
    %v1326 = vpack.c.b16 %v1254, %v1250
    %v1327 = vpack.c.b16 %v1255, %v1251
    %v1328 = vpack.c.b16 %v1256, %v1252
    %v1329 = vpack.c.b16 %v1257, %v1253
    %v1330 = vpack.c.b16 %v1262, %v1258
    %v1331 = vpack.c.b16 %v1263, %v1259
    %v1332 = vpack.c.b16 %v1264, %v1260
    %v1333 = vpack.c.b16 %v1265, %v1261
    %v1334 = vpack.c.b16 %v1270, %v1266
    %v1335 = vpack.c.b16 %v1271, %v1267
    %v1336 = vpack.c.b16 %v1272, %v1268
    %v1337 = vpack.c.b16 %v1273, %v1269
    %1402 = vmatprep.subr.bf16.mxu0 %v1275
    %1403 = vmatpush1.bf16.msra.mxu0 %v1274
    %1404 = vmatprep.subr.bf16.mxu0 %v1279
    %1405 = vmatpush1.bf16.msra.mxu0 %v1278
    %1406 = vmatprep.subr.bf16.mxu0 %v1283
    %1407 = vmatpush1.bf16.msra.mxu0 %v1282
    %1408 = vmatprep.subr.bf16.mxu0 %v1287
    %1409 = vmatpush1.bf16.msra.mxu0 %v1286
    %1410 = vmatprep.subr.bf16.mxu0 %v1291
    %1411 = vmatpush1.bf16.msra.mxu0 %v1290
    %1412 = vmatprep.subr.bf16.mxu0 %v1295
    %1413 = vmatpush1.bf16.msra.mxu0 %v1294
    %1414 = vmatprep.subr.bf16.mxu0 %v1299
    %1415 = vmatpush1.bf16.msra.mxu0 %v1298
    %1416 = vmatprep.subr.bf16.mxu0 %v1303
    %1417 = vmatpush1.bf16.msra.mxu0 %v1302
    %1418 = vmatprep.subr.bf16.mxu0 %v1307
    %1419 = vmatpush1.bf16.msra.mxu0 %v1306
    %1420 = vmatprep.subr.bf16.mxu0 %v1311
    %1421 = vmatpush1.bf16.msra.mxu0 %v1310
    %1422 = vmatprep.subr.bf16.mxu0 %v1315
    %1423 = vmatpush1.bf16.msra.mxu0 %v1314
    %1424 = vmatprep.subr.bf16.mxu0 %v1319
    %1425 = vmatpush1.bf16.msra.mxu0 %v1318
    %1426 = vmatprep.subr.bf16.mxu0 %v1323
    %1427 = vmatpush1.bf16.msra.mxu0 %v1322
    %1428 = vmatprep.subr.bf16.mxu0 %v1327
    %1429 = vmatpush1.bf16.msra.mxu0 %v1326
    %1430 = vmatprep.subr.bf16.mxu0 %v1331
    %1431 = vmatpush1.bf16.msra.mxu0 %v1330
    %1432 = vmatprep.subr.bf16.mxu0 %v1335
    %1433 = vmatpush1.bf16.msra.mxu0 %v1334
    %1434 = vmatprep.mubr.bf16.mxu0 %v459
    %1435 = vmatmul.mubr.bf16.gmra.mrb[0].mxu0 %v458
    %v1436 = vpop.f32.mrb[0].mxu0
    %v1437 = vadd.f32 %v951, %v1436
    %v1438 = vpop.f32.mrb[0].mxu0
    %v1439 = vadd.f32 %v953, %v1438
    %v1440 = vpop.f32.mrb[0].mxu0
    %v1441 = vadd.f32 %v955, %v1440
    %v1442 = vpop.f32.mrb[0].mxu0
    %v1443 = vadd.f32 %v957, %v1442
    %1444 = vmatprep.mubr.bf16.mxu0 %v461
    %1445 = vmatmul.mubr.bf16.gmra.mrb[0].mxu0 %v460
    %v1446 = vpop.f32.mrb[0].mxu0
    %v1447 = vadd.f32 %v961, %v1446
    %v1448 = vpop.f32.mrb[0].mxu0
    %v1449 = vadd.f32 %v963, %v1448
    %v1450 = vpop.f32.mrb[0].mxu0
    %v1451 = vadd.f32 %v965, %v1450
    %v1452 = vpop.f32.mrb[0].mxu0
    %v1453 = vadd.f32 %v967, %v1452
    %1454 = vmatprep.mubr.bf16.mxu0 %v463
    %1455 = vmatmul.mubr.bf16.gmra.mrb[0].mxu0 %v462
    %v1456 = vpop.f32.mrb[0].mxu0
    %v1457 = vadd.f32 %v971, %v1456
    %v1458 = vpop.f32.mrb[0].mxu0
    %v1459 = vadd.f32 %v973, %v1458
    %v1460 = vpop.f32.mrb[0].mxu0
    %v1461 = vadd.f32 %v975, %v1460
    %v1462 = vpop.f32.mrb[0].mxu0
    %v1463 = vadd.f32 %v977, %v1462
    %1464 = vmatprep.mubr.bf16.mxu0 %v465
    %1465 = vmatmul.mubr.bf16.gmra.mrb[0].mxu0 %v464
    %v1466 = vpop.f32.mrb[0].mxu0
    %v1467 = vadd.f32 %v981, %v1466
    %v1468 = vpop.f32.mrb[0].mxu0
    %v1469 = vadd.f32 %v983, %v1468
    %v1470 = vpop.f32.mrb[0].mxu0
    %v1471 = vadd.f32 %v985, %v1470
    %v1472 = vpop.f32.mrb[0].mxu0
    %v1473 = vadd.f32 %v987, %v1472
    %1474 = vmatprep.mubr.bf16.mxu0 %v467
    %1475 = vmatmul.mubr.bf16.gmra.mrb[0].mxu0 %v466
    %v1476 = vpop.f32.mrb[0].mxu0
    %v1477 = vadd.f32 %v991, %v1476
    %v1478 = vpop.f32.mrb[0].mxu0
    %v1479 = vadd.f32 %v993, %v1478
    %v1480 = vpop.f32.mrb[0].mxu0
    %v1481 = vadd.f32 %v995, %v1480
    %v1482 = vpop.f32.mrb[0].mxu0
    %v1483 = vadd.f32 %v997, %v1482
    %1484 = vdwg.mxu0
    %1485 = vmatprep.subr.bf16.mxu0 %v1277
    %1486 = vmatpush1.bf16.msra.mxu0 %v1276
    %1487 = vmatprep.subr.bf16.mxu0 %v1281
    %1488 = vmatpush1.bf16.msra.mxu0 %v1280
    %1489 = vmatprep.subr.bf16.mxu0 %v1285
    %1490 = vmatpush1.bf16.msra.mxu0 %v1284
    %1491 = vmatprep.subr.bf16.mxu0 %v1289
    %1492 = vmatpush1.bf16.msra.mxu0 %v1288
    %1493 = vmatprep.subr.bf16.mxu0 %v1293
    %1494 = vmatpush1.bf16.msra.mxu0 %v1292
    %1495 = vmatprep.subr.bf16.mxu0 %v1297
    %1496 = vmatpush1.bf16.msra.mxu0 %v1296
    %1497 = vmatprep.subr.bf16.mxu0 %v1301
    %1498 = vmatpush1.bf16.msra.mxu0 %v1300
    %1499 = vmatprep.subr.bf16.mxu0 %v1305
    %1500 = vmatpush1.bf16.msra.mxu0 %v1304
    %1501 = vmatprep.subr.bf16.mxu0 %v1309
    %1502 = vmatpush1.bf16.msra.mxu0 %v1308
    %1503 = vmatprep.subr.bf16.mxu0 %v1313
    %1504 = vmatpush1.bf16.msra.mxu0 %v1312
    %1505 = vmatprep.subr.bf16.mxu0 %v1317
    %1506 = vmatpush1.bf16.msra.mxu0 %v1316
    %1507 = vmatprep.subr.bf16.mxu0 %v1321
    %1508 = vmatpush1.bf16.msra.mxu0 %v1320
    %1509 = vmatprep.subr.bf16.mxu0 %v1325
    %1510 = vmatpush1.bf16.msra.mxu0 %v1324
    %1511 = vmatprep.subr.bf16.mxu0 %v1329
    %1512 = vmatpush1.bf16.msra.mxu0 %v1328
    %1513 = vmatprep.subr.bf16.mxu0 %v1333
    %1514 = vmatpush1.bf16.msra.mxu0 %v1332
    %1515 = vmatprep.subr.bf16.mxu0 %v1337
    %1516 = vmatpush1.bf16.msra.mxu0 %v1336
    %1517 = vmatprep.mubr.bf16.mxu0 %v459
    %1518 = vmatmul.mubr.bf16.gmra.mrb[0].mxu0 %v458
    %v1519 = vpop.f32.mrb[0].mxu0
    %v1520 = vadd.f32 %v1034, %v1519
    %v1521 = vpop.f32.mrb[0].mxu0
    %v1522 = vadd.f32 %v1036, %v1521
    %v1523 = vpop.f32.mrb[0].mxu0
    %v1524 = vadd.f32 %v1038, %v1523
    %v1525 = vpop.f32.mrb[0].mxu0
    %v1526 = vadd.f32 %v1040, %v1525
    %1527 = vmatprep.mubr.bf16.mxu0 %v461
    %1528 = vmatmul.mubr.bf16.gmra.mrb[0].mxu0 %v460
    %v1529 = vpop.f32.mrb[0].mxu0
    %v1530 = vadd.f32 %v1044, %v1529
    %v1531 = vpop.f32.mrb[0].mxu0
    %v1532 = vadd.f32 %v1046, %v1531
    %v1533 = vpop.f32.mrb[0].mxu0
    %v1534 = vadd.f32 %v1048, %v1533
    %v1535 = vpop.f32.mrb[0].mxu0
    %v1536 = vadd.f32 %v1050, %v1535
    %1537 = vmatprep.mubr.bf16.mxu0 %v463
    %1538 = vmatmul.mubr.bf16.gmra.mrb[0].mxu0 %v462
    %v1539 = vpop.f32.mrb[0].mxu0
    %v1540 = vadd.f32 %v1054, %v1539
    %v1541 = vpop.f32.mrb[0].mxu0
    %v1542 = vadd.f32 %v1056, %v1541
    %v1543 = vpop.f32.mrb[0].mxu0
    %v1544 = vadd.f32 %v1058, %v1543
    %v1545 = vpop.f32.mrb[0].mxu0
    %v1546 = vadd.f32 %v1060, %v1545
    %1547 = vmatprep.mubr.bf16.mxu0 %v465
    %1548 = vmatmul.mubr.bf16.gmra.mrb[0].mxu0 %v464
    %v1549 = vpop.f32.mrb[0].mxu0
    %v1550 = vadd.f32 %v1064, %v1549
    %v1551 = vpop.f32.mrb[0].mxu0
    %v1552 = vadd.f32 %v1066, %v1551
    %v1553 = vpop.f32.mrb[0].mxu0
    %v1554 = vadd.f32 %v1068, %v1553
    %v1555 = vpop.f32.mrb[0].mxu0
    %v1556 = vadd.f32 %v1070, %v1555
    %1557 = vmatprep.mubr.bf16.mxu0 %v467
    %1558 = vmatmul.mubr.bf16.gmra.mrb[0].mxu0 %v466
    %v1559 = vpop.f32.mrb[0].mxu0
    %v1560 = vadd.f32 %v1074, %v1559
    %v1561 = vpop.f32.mrb[0].mxu0
    %v1562 = vadd.f32 %v1076, %v1561
    %v1563 = vpop.f32.mrb[0].mxu0
    %v1564 = vadd.f32 %v1078, %v1563
    %v1565 = vpop.f32.mrb[0].mxu0
    %v1566 = vadd.f32 %v1080, %v1565
    %1567 = vdwg.mxu0
    %1568 = vst [vmem:[#allocation9] sm:$0xff] %v1437
    %1569 = vst [vmem:[#allocation9 + $0x8] sm:$0xff] %v1439
    %1570 = vst [vmem:[#allocation9 + $0x10] sm:$0xff] %v1520
    %1571 = vst [vmem:[#allocation9 + $0x18] sm:$0xff] %v1522
    %1572 = vst [vmem:[#allocation9 + $0x20] sm:$0xff] %v1441
    %1573 = vst [vmem:[#allocation9 + $0x28] sm:$0xff] %v1443
    %1574 = vst [vmem:[#allocation9 + $0x30] sm:$0xff] %v1524
    %1575 = vst [vmem:[#allocation9 + $0x38] sm:$0xff] %v1526
    %1576 = vst [vmem:[#allocation9 + $0x40] sm:$0xff] %v1447
    %1577 = vst [vmem:[#allocation9 + $0x48] sm:$0xff] %v1449
    %1578 = vst [vmem:[#allocation9 + $0x50] sm:$0xff] %v1530
    %1579 = vst [vmem:[#allocation9 + $0x58] sm:$0xff] %v1532
    %1580 = vst [vmem:[#allocation9 + $0x60] sm:$0xff] %v1451
    %1581 = vst [vmem:[#allocation9 + $0x68] sm:$0xff] %v1453
    %1582 = vst [vmem:[#allocation9 + $0x70] sm:$0xff] %v1534
    %1583 = vst [vmem:[#allocation9 + $0x78] sm:$0xff] %v1536
    %1584 = vst [vmem:[#allocation9 + $0x80] sm:$0xff] %v1457
    %1585 = vst [vmem:[#allocation9 + $0x88] sm:$0xff] %v1459
    %1586 = vst [vmem:[#allocation9 + $0x90] sm:$0xff] %v1540
    %1587 = vst [vmem:[#allocation9 + $0x98] sm:$0xff] %v1542
    %1588 = vst [vmem:[#allocation9 + $0xa0] sm:$0xff] %v1461
    %1589 = vst [vmem:[#allocation9 + $0xa8] sm:$0xff] %v1463
    %1590 = vst [vmem:[#allocation9 + $0xb0] sm:$0xff] %v1544
    %1591 = vst [vmem:[#allocation9 + $0xb8] sm:$0xff] %v1546
    %1592 = vst [vmem:[#allocation9 + $0xc0] sm:$0xff] %v1467
    %1593 = vst [vmem:[#allocation9 + $0xc8] sm:$0xff] %v1469
    %1594 = vst [vmem:[#allocation9 + $0xd0] sm:$0xff] %v1550
    %1595 = vst [vmem:[#allocation9 + $0xd8] sm:$0xff] %v1552
    %1596 = vst [vmem:[#allocation9 + $0xe0] sm:$0xff] %v1471
    %1597 = vst [vmem:[#allocation9 + $0xe8] sm:$0xff] %v1473
    %1598 = vst [vmem:[#allocation9 + $0xf0] sm:$0xff] %v1554
    %1599 = vst [vmem:[#allocation9 + $0xf8] sm:$0xff] %v1556
    %1600 = vst [vmem:[#allocation9 + $0x100] sm:$0xff] %v1477
    %1601 = vst [vmem:[#allocation9 + $0x108] sm:$0xff] %v1479
    %1602 = vst [vmem:[#allocation9 + $0x110] sm:$0xff] %v1560
    %1603 = vst [vmem:[#allocation9 + $0x118] sm:$0xff] %v1562
    %1604 = vst [vmem:[#allocation9 + $0x120] sm:$0xff] %v1481
    %1605 = vst [vmem:[#allocation9 + $0x128] sm:$0xff] %v1483
    %1606 = vst [vmem:[#allocation9 + $0x130] sm:$0xff] %v1564
    %1607 = vst [vmem:[#allocation9 + $0x138] sm:$0xff] %v1566
    // Predicated region
    $region26: #{tpu_custom_call.1} parent=1 // pred_check
      _
    $region27: #{tpu_custom_call.1} parent=1 // pred_check_branch
      %1609 = sbr.rel (0) target = $region29
    $region28: #{tpu_custom_call.1} parent=1 // pred_region
      %s1611 = ssub.s32 5120, 5120
      %1612 = vsyncadd [#allocation5], %s1611
      %s1614 = sshll.u32 [#allocation9], 4
      %s1615 = int_to_ptr.vmem [resolvable:$true] %s1614
      %1617 = dma.vmem_to_hbm [thread:$0]  %s1615, 5120, %s3, [#allocation5]
    $region29: #{tpu_custom_call.1} parent=1 // pred_fallthru
      _
    // Predicated region
    $region30: #{tpu_custom_call.1} parent=1 // pred_check
      _
    $region31: #{tpu_custom_call.1} parent=1 // pred_check_branch
      %1619 = sbr.rel (0) target = $region33
    $region32: #{tpu_custom_call.1} parent=1 // pred_region
      %1620 = dma.done [#allocation5], 5120
    $region33: #{tpu_custom_call.1} parent=1 // pred_fallthru
      _
    %1621 = vsyncpa [#allocation4], 1
    %1622 = vsyncpa [#allocation7], 1
    %1623 = vsyncpa [#allocation5], 1

</llo_original>
